<compile_context>
chip_gen: v5e
topology: v5e:2x2
jax: 0.10.0
libtpu: 0.0.40
codegen_flags: <defaults>
</compile_context>

<pallas_src>
from functools import partial

import jax
import jax.numpy as jnp
from jax.experimental import pallas as pl
from jax.experimental.pallas import tpu as pltpu


# ----------------------------- Pallas kernels ------------------------------ #

def graphconv_score_l1_kernel(a_ref, xw_ref, root_ref, prow_ref, h_ref, s_ref):
    """Layer-1 GraphConv + ReLU + TopKPooling score (premultiplied form).

    xw = x @ W_rel (bf16, resident), root = x @ W_root + b_rel (row tile).
    """
    # int8 -> f32 -> bf16 (both converts are guaranteed-supported; exact for counts)
    a = a_ref[...].astype(jnp.float32).astype(jnp.bfloat16)
    agg = jnp.dot(a, xw_ref[...], preferred_element_type=jnp.float32)     # [tm, H]
    h = jnp.maximum(agg + root_ref[...], 0.0)
    h_ref[...] = h
    # score = tanh((h . p) / ||p||); p is pre-scaled by 1/||p|| in the wrapper.
    s_ref[...] = jnp.tanh(jnp.sum(h * prow_ref[...], axis=-1, keepdims=True))


def graphconv_score_fused_kernel(a_ref, hg_ref, hrow_ref, wf_ref, brel_ref, prow_ref,
                                 h_ref, s_ref):
    """Layers 2/3: GraphConv + ReLU + score with a single fused K=2H epilogue matmul.

    hg is the gated (pooled) node features in bf16; dropped nodes are zero, so
    the filtered adjacency never needs to be materialized.
    """
    a = a_ref[...].astype(jnp.float32).astype(jnp.bfloat16)
    agg = jnp.dot(a, hg_ref[...], preferred_element_type=jnp.float32)     # [tm, H] f32
    cat = jnp.concatenate([agg.astype(jnp.bfloat16), hrow_ref[...]], axis=-1)  # [tm, 2H]
    out = jnp.dot(cat, wf_ref[...], preferred_element_type=jnp.float32) + brel_ref[...]
    h = jnp.maximum(out, 0.0)
    h_ref[...] = h
    s_ref[...] = jnp.tanh(jnp.sum(h * prow_ref[...], axis=-1, keepdims=True))


def pool_readout_kernel(*refs, num_graphs, hidden, nodes_per_graph, num_classes):
    """Gate pooled features, compute [gmp | gap] per graph.

    num_classes == 0: outputs (readout [B,2H], gated bf16 features [N,H]).
    num_classes  > 0: the classifier head is fused; outputs log_softmax [B,C].
    """
    if num_classes > 0:
        (h_ref, gate_ref, sel_ref, memb_ref, gid_ref, r12_ref,
         w1_ref, b1_ref, w2_ref, b2_ref, w3_ref, b3_ref, out_ref) = refs
    else:
        (h_ref, gate_ref, sel_ref, memb_ref, gid_ref, ro_ref, hg_ref) = refs

    neg = jnp.float32(-3.0e38)
    h = h_ref[...]
    sel = sel_ref[...]                                   # [N,1] 0/1 survivors
    xg = h * gate_ref[...]                               # x[perm] * score[perm]; 0 on dropped

    # global mean pool: one MXU matmul + exact divide (counts are exact small ints)
    memb = memb_ref[...]                                 # [B, N]
    gap_sum = jnp.dot(memb, xg, preferred_element_type=jnp.float32)       # [B, H]
    cnt = jnp.dot(memb, sel, preferred_element_type=jnp.float32)          # [B, 1]
    gap = gap_sum / jnp.maximum(cnt, 1.0)

    # global max pool over surviving nodes
    if nodes_per_graph > 0:
        # contiguous equal-size graphs: single reshape + sublane reduction, O(1) in B
        masked = jnp.where(sel > 0.5, xg, neg)
        gmp = jnp.max(masked.reshape(num_graphs, nodes_per_graph, hidden), axis=1)
    else:
        gid = gid_ref[...]                               # [N,1] graph id as f32

        def body(b, acc):
            mask_b = (gid == b.astype(jnp.float32)) & (sel > 0.5)
            cand = jnp.max(jnp.where(mask_b, xg, neg), axis=0, keepdims=True)  # [1, H]
            row = jax.lax.broadcasted_iota(jnp.int32, (num_graphs, 1), 0) == b
            return jnp.where(row, cand, acc)

        gmp = jax.lax.fori_loop(0, num_graphs, body,
                                jnp.full((num_graphs, hidden), neg, jnp.float32))
    gmp = jnp.where(cnt > 0.5, gmp, 0.0)                 # empty graph -> 0, not -3e38

    if num_classes == 0:
        ro_ref[:, 0:hidden] = gmp
        ro_ref[:, hidden:2 * hidden] = gap
        hg_ref[...] = xg.astype(jnp.bfloat16)            # next conv's gated bf16 input
        return

    # fused classifier head on x = (x1 + x2) + x3; W1 is split to avoid a lane concat.
    xa = gmp + r12_ref[:, 0:hidden]
    xb = gap + r12_ref[:, hidden:2 * hidden]
    hh = (jnp.dot(xa, w1_ref[0:hidden, :], preferred_element_type=jnp.float32)
          + jnp.dot(xb, w1_ref[hidden:2 * hidden, :], preferred_element_type=jnp.float32)
          + b1_ref[...])
    hh = jnp.maximum(hh, 0.0)
    # TODO(synk): F.dropout(p=0.5) is treated as eval-mode identity (RNG not reproducible).
    hh = jnp.maximum(jnp.dot(hh, w2_ref[...], preferred_element_type=jnp.float32)
                     + b2_ref[...], 0.0)
    z = jnp.dot(hh, w3_ref[...], preferred_element_type=jnp.float32) + b3_ref[...]
    zmax = jnp.max(z, axis=-1, keepdims=True)
    lse = jnp.log(jnp.sum(jnp.exp(z - zmax), axis=-1, keepdims=True)) + zmax
    out_ref[...] = z - lse                               # log_softmax


# ------------------------------ thin wrappers ------------------------------ #

def _full_vmem(n_specs):
    return [pl.BlockSpec(memory_space=pltpu.MemorySpace.VMEM) for _ in range(n_specs)]


def _vmem_budget():
    """Per-generation VMEM request: ~3/4 of capacity, capped at 100 MiB
    (~48 MiB on v7x's 64 MiB per-TC VMEM, ~96 MiB on v5e/v6e's 128 MiB)."""
    cap = 128 * 1024 * 1024
    try:
        cap = int(pltpu.get_tpu_info().vmem_capacity_bytes)
    except Exception:
        pass
    return max(32 * 1024 * 1024, min(cap * 3 // 4, 100 * 1024 * 1024))


def _pick_row_tile(n, hid, vmem_budget):
    """Row tile for the conv kernels: multiple of 32 (int8 (32,128) sublane tile),
    divides n, sized so double-buffered int8 A tiles + the in-kernel upcast +
    resident bf16 operands fit the VMEM budget (capped at 512)."""
    if n % 32 != 0:
        return n                                        # single full-size block
    resident = 2 * (n * hid * 2) + 2 * (2 * hid * hid * 2) + 8 * hid * 4
    avail = max(vmem_budget - resident, 32 * (6 * n + 16 * hid))
    t = avail // (6 * n + 16 * hid)
    t = max(32, min(512, int(t)))
    t -= t % 32
    t = min(t, n)
    while n % t != 0:
        t -= 32
    return t


def graph_conv_score_l1(a_i8, xw_bf16, root_f32, p_scaled, *, row_tile, vmem_limit):
    n = a_i8.shape[0]
    hid = xw_bf16.shape[1]
    return pl.pallas_call(
        graphconv_score_l1_kernel,
        grid=(n // row_tile,),
        out_shape=(jax.ShapeDtypeStruct((n, hid), jnp.float32),
                   jax.ShapeDtypeStruct((n, 1), jnp.float32)),
        in_specs=[
            pl.BlockSpec((row_tile, n), lambda i: (i, 0)),       # A row tile, int8
            pl.BlockSpec((n, hid), lambda i: (0, 0)),            # x @ W_rel, resident bf16
            pl.BlockSpec((row_tile, hid), lambda i: (i, 0)),     # x @ W_root + b, row tile
            pl.BlockSpec((1, hid), lambda i: (0, 0)),            # p / ||p||
        ],
        out_specs=(pl.BlockSpec((row_tile, hid), lambda i: (i, 0)),
                   pl.BlockSpec((row_tile, 1), lambda i: (i, 0))),
        compiler_params=pltpu.CompilerParams(
            dimension_semantics=("parallel",),
            vmem_limit_bytes=vmem_limit),
    )(a_i8, xw_bf16, root_f32, p_scaled)


def graph_conv_score_fused(a_i8, hg_bf16, w_fused_bf16, b_rel, p_scaled,
                           *, row_tile, vmem_limit):
    n = a_i8.shape[0]
    hid = hg_bf16.shape[1]
    return pl.pallas_call(
        graphconv_score_fused_kernel,
        grid=(n // row_tile,),
        out_shape=(jax.ShapeDtypeStruct((n, hid), jnp.float32),
                   jax.ShapeDtypeStruct((n, 1), jnp.float32)),
        in_specs=[
            pl.BlockSpec((row_tile, n), lambda i: (i, 0)),       # A row tile, int8
            pl.BlockSpec((n, hid), lambda i: (0, 0)),            # gated h, resident bf16
            pl.BlockSpec((row_tile, hid), lambda i: (i, 0)),     # same gated h, root row tile
            pl.BlockSpec((2 * hid, hid), lambda i: (0, 0)),      # [W_rel; W_root] bf16
            pl.BlockSpec((1, hid), lambda i: (0, 0)),            # b_rel
            pl.BlockSpec((1, hid), lambda i: (0, 0)),            # p / ||p||
        ],
        out_specs=(pl.BlockSpec((row_tile, hid), lambda i: (i, 0)),
                   pl.BlockSpec((row_tile, 1), lambda i: (i, 0))),
        compiler_params=pltpu.CompilerParams(
            dimension_semantics=("parallel",),
            vmem_limit_bytes=vmem_limit),
    )(a_i8, hg_bf16, hg_bf16, w_fused_bf16, b_rel, p_scaled)


def pool_readout(h, gate, sel_col, memb, gid_col, *, nodes_per_graph, vmem_limit):
    # TODO(synk): tile this over node chunks (running max + partial sums) for very
    # large N; at moderate N the whole-array VMEM residency is within budget.
    n, hid = h.shape
    b = memb.shape[0]
    kern = partial(pool_readout_kernel, num_graphs=b, hidden=hid,
                   nodes_per_graph=nodes_per_graph, num_classes=0)
    return pl.pallas_call(
        kern,
        out_shape=(jax.ShapeDtypeStruct((b, 2 * hid), jnp.float32),
                   jax.ShapeDtypeStruct((n, hid), jnp.bfloat16)),
        in_specs=_full_vmem(5),
        out_specs=tuple(_full_vmem(2)),
        compiler_params=pltpu.CompilerParams(vmem_limit_bytes=vmem_limit),
    )(h, gate, sel_col, memb, gid_col)


def pool_readout_with_head(h, gate, sel_col, memb, gid_col, r12, lin1, lin2, lin3,
                           *, nodes_per_graph, vmem_limit):
    n, hid = h.shape
    b = memb.shape[0]
    c = lin3["w"].shape[1]
    kern = partial(pool_readout_kernel, num_graphs=b, hidden=hid,
                   nodes_per_graph=nodes_per_graph, num_classes=c)
    return pl.pallas_call(
        kern,
        out_shape=jax.ShapeDtypeStruct((b, c), jnp.float32),
        in_specs=_full_vmem(12),
        out_specs=pl.BlockSpec(memory_space=pltpu.MemorySpace.VMEM),
        compiler_params=pltpu.CompilerParams(vmem_limit_bytes=vmem_limit),
    )(h, gate, sel_col, memb, gid_col, r12,
      lin1["w"], lin1["b"], lin2["w"], lin2["b"], lin3["w"], lin3["b"])


# -------------------- glue: per-graph top-k node selection ------------------ #

def topk_select(scores, batch, valid, ratio, num_graphs):
    """scores [N], batch [N] int graph ids, valid [N] 0/1 -> selection mask [N] 0/1.

    Single packed int32 sort key (graph id in the high bits, flipped quantized
    score in the low bits) + one stable argsort: graph asc, score desc, index asc.
    """
    n = scores.shape[0]
    gid_bits = max(1, int(num_graphs).bit_length())
    score_bits = max(1, 30 - gid_bits)
    scale = float((1 << score_bits) - 1)

    idx = jnp.arange(n, dtype=jnp.int32)
    validb = valid > 0.5
    gid = jnp.where(validb, batch.astype(jnp.int32), num_graphs)  # invalid -> trailing group
    q = jnp.clip(jnp.round((1.0 - scores) * 0.5 * scale), 0.0, scale).astype(jnp.int32)
    key = gid * (1 << score_bits) + q
    order = jnp.argsort(key)                                      # stable
    sorted_gid = gid[order]

    counts = jnp.sum((batch[None, :] == jnp.arange(num_graphs, dtype=jnp.int32)[:, None])
                     & validb[None, :], axis=1).astype(jnp.int32)            # [B]
    starts = jnp.concatenate([jnp.zeros((1,), jnp.int32),
                              jnp.cumsum(counts)[:-1].astype(jnp.int32)])
    k_per_graph = jnp.ceil(ratio * counts.astype(jnp.float32)).astype(jnp.int32)

    safe_gid = jnp.minimum(sorted_gid, num_graphs - 1)
    rank_in_graph = idx - starts[safe_gid]
    keep_sorted = (rank_in_graph < k_per_graph[safe_gid]) & (sorted_gid < num_graphs)
    return jnp.zeros((n,), jnp.float32).at[order].set(keep_sorted.astype(jnp.float32))


# ------------------------------- full forward ------------------------------ #

def topkpool_forward(x, adj, batch, batch_onehot, params, ratio=0.8,
                     row_tile=None, nodes_per_graph=0):
    n = x.shape[0]
    num_graphs = batch_onehot.shape[0]
    hidden = params["conv1"]["w_rel"].shape[1]

    vmem_limit = _vmem_budget()
    if row_tile is None:
        row_tile = _pick_row_tile(n, hidden, vmem_limit)

    # fast (reshape) max-pool path only when graphs are contiguous & equal-size
    npg = nodes_per_graph
    if not (npg > 0 and npg * num_graphs == n and npg % 8 == 0):
        npg = 0

    a_i8 = adj.astype(jnp.int8)              # small integer edge counts: exact in int8
    memb = batch_onehot                      # [B, N]
    gid_col = batch.astype(jnp.float32)[:, None]

    valid = jnp.ones((n,), jnp.float32)      # cumulative selection mask
    readout_sum = None
    hg = None
    for i in (1, 2, 3):
        cp = params[f"conv{i}"]
        pvec = params[f"pool{i}"]["p"]                                   # [H, 1]
        p_scaled = (pvec / jnp.sqrt(jnp.sum(pvec * pvec))).reshape(1, -1)  # p/||p||

        if i == 1:
            # F < hidden: premultiply in XLA; kernel only does the N^2 aggregation.
            xw_rel = jnp.dot(x, cp["w_rel"]).astype(jnp.bfloat16)        # [N, H] bf16
            root = jnp.dot(x, cp["w_root"]) + cp["b_rel"]                # [N, H] f32
            h, scores = graph_conv_score_l1(a_i8, xw_rel, root, p_scaled,
                                            row_tile=row_tile, vmem_limit=vmem_limit)
        else:
            w_fused = jnp.concatenate([cp["w_rel"], cp["w_root"]],
                                      axis=0).astype(jnp.bfloat16)       # [2H, H]
            h, scores = graph_conv_score_fused(a_i8, hg, w_fused, cp["b_rel"], p_scaled,
                                               row_tile=row_tile, vmem_limit=vmem_limit)

        sel = topk_select(scores[:, 0], batch, valid, ratio, num_graphs)  # [N]
        sel_col = sel[:, None]
        gate = scores * sel_col                                           # [N, 1]

        if i < 3:
            ro, hg = pool_readout(h, gate, sel_col, memb, gid_col,
                                  nodes_per_graph=npg, vmem_limit=vmem_limit)
            readout_sum = ro if readout_sum is None else readout_sum + ro
            valid = sel
        else:
            return pool_readout_with_head(h, gate, sel_col, memb, gid_col, readout_sum,
                                          params["lin1"], params["lin2"], params["lin3"],
                                          nodes_per_graph=npg, vmem_limit=vmem_limit)


# ---------------------------------- main ----------------------------------- #

if __name__ == "__main__":
    NUM_FEATURES, NUM_CLASSES, HIDDEN = 32, 6, 128
    NUM_GRAPHS, NODES_PER_GRAPH = 2, 16
    N = NUM_GRAPHS * NODES_PER_GRAPH

    key = jax.random.PRNGKey(0)
    ks = jax.random.split(key, 20)

    def dense(k, shape, scale=0.1):
        return scale * jax.random.normal(k, shape, dtype=jnp.float32)

    params = {
        "conv1": {"w_rel": dense(ks[0], (NUM_FEATURES, HIDDEN)),
                  "b_rel": dense(ks[1], (1, HIDDEN)),
                  "w_root": dense(ks[2], (NUM_FEATURES, HIDDEN))},
        "conv2": {"w_rel": dense(ks[3], (HIDDEN, HIDDEN)),
                  "b_rel": dense(ks[4], (1, HIDDEN)),
                  "w_root": dense(ks[5], (HIDDEN, HIDDEN))},
        "conv3": {"w_rel": dense(ks[6], (HIDDEN, HIDDEN)),
                  "b_rel": dense(ks[7], (1, HIDDEN)),
                  "w_root": dense(ks[8], (HIDDEN, HIDDEN))},
        "pool1": {"p": dense(ks[9], (HIDDEN, 1))},
        "pool2": {"p": dense(ks[10], (HIDDEN, 1))},
        "pool3": {"p": dense(ks[11], (HIDDEN, 1))},
        "lin1": {"w": dense(ks[12], (2 * HIDDEN, 128)), "b": dense(ks[13], (1, 128))},
        "lin2": {"w": dense(ks[14], (128, 64)), "b": dense(ks[15], (1, 64))},
        "lin3": {"w": dense(ks[16], (64, NUM_CLASSES)), "b": dense(ks[17], (1, NUM_CLASSES))},
    }

    x = jax.random.normal(ks[18], (N, NUM_FEATURES), dtype=jnp.float32)

    # deterministic edge_index: bidirectional ring inside each graph
    src, dst = [], []
    for g in range(NUM_GRAPHS):
        base = g * NODES_PER_GRAPH
        for i in range(NODES_PER_GRAPH):
            u, v = base + i, base + (i + 1) % NODES_PER_GRAPH
            src += [u, v]
            dst += [v, u]
    src = jnp.array(src, jnp.int32)
    dst = jnp.array(dst, jnp.int32)
    adj = jnp.zeros((N, N), jnp.float32).at[dst, src].add(1.0)   # A[target, source]

    batch = jnp.repeat(jnp.arange(NUM_GRAPHS, dtype=jnp.int32), NODES_PER_GRAPH)
    batch_onehot = (batch[None, :] == jnp.arange(NUM_GRAPHS)[:, None]).astype(jnp.float32)

    fwd = jax.jit(topkpool_forward,
                  static_argnames=("ratio", "row_tile", "nodes_per_graph"))
    out = fwd(x, adj, batch, batch_onehot, params, ratio=0.8,
              nodes_per_graph=NODES_PER_GRAPH)
    out = jax.block_until_ready(out)
    assert out.shape == (NUM_GRAPHS, NUM_CLASSES), out.shape
    assert bool(jnp.all(jnp.isfinite(out)))
    print("KERNEL_OK")
</pallas_src>

<mosaic_0001>
module attributes {stable_mosaic.version = 11 : i64} {
  func.func @graphconv_score_l1_kernel(%arg0: i32, %arg1: memref<32x32xi8, #tpu.memory_space<vmem>>, %arg2: memref<32x128xbf16, #tpu.memory_space<vmem>>, %arg3: memref<32x128xf32, #tpu.memory_space<vmem>>, %arg4: memref<1x128xf32, #tpu.memory_space<vmem>>, %arg5: memref<32x128xf32, #tpu.memory_space<vmem>>, %arg6: memref<32x1xf32, #tpu.memory_space<vmem>>) attributes {dimension_semantics = [#tpu.dimension_semantics<parallel>], iteration_bounds = array<i64: 1>, scalar_prefetch = 0 : i64, scratch_operands = 0 : i64, tpu.core_type = #tpu.core_type<tc>, window_params = [{transform_indices = @transform_0, window_bounds = array<i64: 32, 32>}, {pipeline_mode = #tpu.pipeline_mode<synchronous>, transform_indices = @transform_1, window_bounds = array<i64: 32, 128>}, {transform_indices = @transform_2, window_bounds = array<i64: 32, 128>}, {pipeline_mode = #tpu.pipeline_mode<synchronous>, transform_indices = @transform_3, window_bounds = array<i64: 1, 128>}, {transform_indices = @transform_4, window_bounds = array<i64: 32, 128>}, {transform_indices = @transform_5, window_bounds = array<i64: 32, 1>}]} {
    %c0 = arith.constant 0 : index
    %c0_0 = arith.constant 0 : index
    %0 = vector.load %arg1[%c0, %c0_0] : memref<32x32xi8, #tpu.memory_space<vmem>>, vector<32x32xi8>
    %1 = arith.sitofp %0 : vector<32x32xi8> to vector<32x32xf32>
    %2 = arith.truncf %1 : vector<32x32xf32> to vector<32x32xbf16>
    %c0_1 = arith.constant 0 : index
    %c0_2 = arith.constant 0 : index
    %3 = vector.load %arg2[%c0_1, %c0_2] : memref<32x128xbf16, #tpu.memory_space<vmem>>, vector<32x128xbf16>
    %cst = arith.constant dense<0.000000e+00> : vector<32x128xf32>
    %4 = tpu.matmul %2, %3, %cst {dimension_numbers = #tpu.dot_dimension_numbers<[1], [0], [0], [1], [0, 0, 1, 1], [], []>} : vector<32x32xbf16>, vector<32x128xbf16>, vector<32x128xf32> -> vector<32x128xf32>
    %c0_3 = arith.constant 0 : index
    %c0_4 = arith.constant 0 : index
    %5 = vector.load %arg3[%c0_3, %c0_4] : memref<32x128xf32, #tpu.memory_space<vmem>>, vector<32x128xf32>
    %6 = arith.addf %4, %5 : vector<32x128xf32>
    %cst_5 = arith.constant 0.000000e+00 : f32
    %7 = vector.broadcast %cst_5 : f32 to vector<32x128xf32>
    %8 = arith.maximumf %6, %7 : vector<32x128xf32>
    %c0_6 = arith.constant 0 : index
    %c0_7 = arith.constant 0 : index
    %9 = vector.load %arg5[%c0_6, %c0_7] : memref<32x128xf32, #tpu.memory_space<vmem>>, vector<32x128xf32>
    tpu.vector_store %arg5[%c0_6, %c0_7], %8 {strides = array<i32>} : memref<32x128xf32, #tpu.memory_space<vmem>>, vector<32x128xf32>,
    %c0_8 = arith.constant 0 : index
    %c0_9 = arith.constant 0 : index
    %10 = vector.load %arg4[%c0_8, %c0_9] : memref<1x128xf32, #tpu.memory_space<vmem>>, vector<1x128xf32>
    %11 = vector.broadcast %10 : vector<1x128xf32> to vector<32x128xf32>
    %12 = arith.mulf %8, %11 : vector<32x128xf32>
    %cst_10 = arith.constant dense<0.000000e+00> : vector<32xf32>
    %13 = vector.multi_reduction <add>, %12, %cst_10 [1] : vector<32x128xf32> to vector<32xf32>
    %14 = vector.shape_cast %13 : vector<32xf32> to vector<32x1xf32>
    %15 = math.tanh %14 : vector<32x1xf32>
    %c0_11 = arith.constant 0 : index
    %c0_12 = arith.constant 0 : index
    %16 = vector.load %arg6[%c0_11, %c0_12] : memref<32x1xf32, #tpu.memory_space<vmem>>, vector<32x1xf32>
    tpu.vector_store %arg6[%c0_11, %c0_12], %15 {strides = array<i32>} : memref<32x1xf32, #tpu.memory_space<vmem>>, vector<32x1xf32>,
    return
  }
  func.func @transform_0(%arg0: i32) -> (i32, i32) {
    %c0_i32 = arith.constant 0 : i32
    %c0_i32_0 = arith.constant 0 : i32
    return %arg0, %c0_i32 : i32, i32
  }
  func.func @transform_1(%arg0: i32) -> (i32, i32) {
    %c0_i32 = arith.constant 0 : i32
    %c0_i32_0 = arith.constant 0 : i32
    %c0_i32_1 = arith.constant 0 : i32
    return %c0_i32, %c0_i32_0 : i32, i32
  }
  func.func @transform_2(%arg0: i32) -> (i32, i32) {
    %c0_i32 = arith.constant 0 : i32
    %c0_i32_0 = arith.constant 0 : i32
    return %arg0, %c0_i32 : i32, i32
  }
  func.func @transform_3(%arg0: i32) -> (i32, i32) {
    %c0_i32 = arith.constant 0 : i32
    %c0_i32_0 = arith.constant 0 : i32
    %c0_i32_1 = arith.constant 0 : i32
    return %c0_i32, %c0_i32_0 : i32, i32
  }
  func.func @transform_4(%arg0: i32) -> (i32, i32) {
    %c0_i32 = arith.constant 0 : i32
    %c0_i32_0 = arith.constant 0 : i32
    return %arg0, %c0_i32 : i32, i32
  }
  func.func @transform_5(%arg0: i32) -> (i32, i32) {
    %c0_i32 = arith.constant 0 : i32
    %c0_i32_0 = arith.constant 0 : i32
    return %arg0, %c0_i32 : i32, i32
  }
}

module attributes {stable_mosaic.version = 11 : i64} {
  func.func @pool_readout_kernel(%arg0: memref<32x128xf32, #tpu.memory_space<vmem>>, %arg1: memref<32x1xf32, #tpu.memory_space<vmem>>, %arg2: memref<32x1xf32, #tpu.memory_space<vmem>>, %arg3: memref<2x32xf32, #tpu.memory_space<vmem>>, %arg4: memref<32x1xf32, #tpu.memory_space<vmem>>, %arg5: memref<2x256xf32, #tpu.memory_space<vmem>>, %arg6: memref<32x128xbf16, #tpu.memory_space<vmem>>) attributes {dimension_semantics = [], scalar_prefetch = 0 : i64, scratch_operands = 0 : i64, tpu.core_type = #tpu.core_type<tc>} {
    %c0 = arith.constant 0 : index
    %c0_0 = arith.constant 0 : index
    %0 = vector.load %arg0[%c0, %c0_0] : memref<32x128xf32, #tpu.memory_space<vmem>>, vector<32x128xf32>
    %c0_1 = arith.constant 0 : index
    %c0_2 = arith.constant 0 : index
    %1 = vector.load %arg2[%c0_1, %c0_2] : memref<32x1xf32, #tpu.memory_space<vmem>>, vector<32x1xf32>
    %c0_3 = arith.constant 0 : index
    %c0_4 = arith.constant 0 : index
    %2 = vector.load %arg1[%c0_3, %c0_4] : memref<32x1xf32, #tpu.memory_space<vmem>>, vector<32x1xf32>
    %3 = vector.broadcast %2 : vector<32x1xf32> to vector<32x128xf32>
    %4 = arith.mulf %0, %3 : vector<32x128xf32>
    %c0_5 = arith.constant 0 : index
    %c0_6 = arith.constant 0 : index
    %5 = vector.load %arg3[%c0_5, %c0_6] : memref<2x32xf32, #tpu.memory_space<vmem>>, vector<2x32xf32>
    %cst = arith.constant dense<0.000000e+00> : vector<2x128xf32>
    %6 = tpu.matmul %5, %4, %cst {dimension_numbers = #tpu.dot_dimension_numbers<[1], [0], [0], [1], [0, 0, 1, 1], [], []>} : vector<2x32xf32>, vector<32x128xf32>, vector<2x128xf32> -> vector<2x128xf32>
    %cst_7 = arith.constant dense<0.000000e+00> : vector<2x1xf32>
    %7 = tpu.matmul %5, %1, %cst_7 {dimension_numbers = #tpu.dot_dimension_numbers<[1], [0], [0], [1], [0, 0, 1, 1], [], []>} : vector<2x32xf32>, vector<32x1xf32>, vector<2x1xf32> -> vector<2x1xf32>
    %cst_8 = arith.constant 1.000000e+00 : f32
    %8 = vector.broadcast %cst_8 : f32 to vector<2x1xf32>
    %9 = arith.maximumf %7, %8 : vector<2x1xf32>
    %10 = vector.broadcast %9 : vector<2x1xf32> to vector<2x128xf32>
    %11 = arith.divf %6, %10 : vector<2x128xf32>
    %cst_9 = arith.constant 5.000000e-01 : f32
    %12 = vector.broadcast %cst_9 : f32 to vector<32x1xf32>
    %13 = arith.cmpf ogt, %1, %12 : vector<32x1xf32>
    %cst_10 = arith.constant -3.000000e+38 : f32
    %14 = vector.shape_cast %13 : vector<32x1xi1> to vector<32x1xi1>
    %15 = vector.broadcast %14 : vector<32x1xi1> to vector<32x128xi1>
    %16 = vector.broadcast %cst_10 : f32 to vector<32x128xf32>
    %17 = arith.select %15, %4, %16 : vector<32x128xi1>, vector<32x128xf32>
    %18 = vector.shape_cast %17 : vector<32x128xf32> to vector<2x16x128xf32>
    %cst_11 = arith.constant dense<0xFF800000> : vector<2x128xf32>
    %19 = vector.multi_reduction <maximumf>, %18, %cst_11 [1] : vector<2x16x128xf32> to vector<2x128xf32>
    %cst_12 = arith.constant 5.000000e-01 : f32
    %20 = vector.broadcast %cst_12 : f32 to vector<2x1xf32>
    %21 = arith.cmpf ogt, %7, %20 : vector<2x1xf32>
    %cst_13 = arith.constant 0.000000e+00 : f32
    %22 = vector.shape_cast %21 : vector<2x1xi1> to vector<2x1xi1>
    %23 = vector.broadcast %22 : vector<2x1xi1> to vector<2x128xi1>
    %24 = vector.broadcast %cst_13 : f32 to vector<2x128xf32>
    %25 = arith.select %23, %19, %24 : vector<2x128xi1>, vector<2x128xf32>
    %c0_14 = arith.constant 0 : index
    %c0_15 = arith.constant 0 : index
    %26 = vector.load %arg5[%c0_14, %c0_15] : memref<2x256xf32, #tpu.memory_space<vmem>>, vector<2x128xf32>
    tpu.vector_store %arg5[%c0_14, %c0_15], %25 {strides = array<i32>} : memref<2x256xf32, #tpu.memory_space<vmem>>, vector<2x128xf32>,
    %c0_16 = arith.constant 0 : index
    %c128 = arith.constant 128 : index
    %27 = vector.load %arg5[%c0_16, %c128] : memref<2x256xf32, #tpu.memory_space<vmem>>, vector<2x128xf32>
    tpu.vector_store %arg5[%c0_16, %c128], %11 {strides = array<i32>} : memref<2x256xf32, #tpu.memory_space<vmem>>, vector<2x128xf32>,
    %28 = arith.truncf %4 : vector<32x128xf32> to vector<32x128xbf16>
    %c0_17 = arith.constant 0 : index
    %c0_18 = arith.constant 0 : index
    %29 = vector.load %arg6[%c0_17, %c0_18] : memref<32x128xbf16, #tpu.memory_space<vmem>>, vector<32x128xbf16>
    tpu.vector_store %arg6[%c0_17, %c0_18], %28 {strides = array<i32>} : memref<32x128xbf16, #tpu.memory_space<vmem>>, vector<32x128xbf16>,
    return
  }
}

module attributes {stable_mosaic.version = 11 : i64} {
  func.func @graphconv_score_fused_kernel(%arg0: i32, %arg1: memref<32x32xi8, #tpu.memory_space<vmem>>, %arg2: memref<32x128xbf16, #tpu.memory_space<vmem>>, %arg3: memref<32x128xbf16, #tpu.memory_space<vmem>>, %arg4: memref<256x128xbf16, #tpu.memory_space<vmem>>, %arg5: memref<1x128xf32, #tpu.memory_space<vmem>>, %arg6: memref<1x128xf32, #tpu.memory_space<vmem>>, %arg7: memref<32x128xf32, #tpu.memory_space<vmem>>, %arg8: memref<32x1xf32, #tpu.memory_space<vmem>>) attributes {dimension_semantics = [#tpu.dimension_semantics<parallel>], iteration_bounds = array<i64: 1>, scalar_prefetch = 0 : i64, scratch_operands = 0 : i64, tpu.core_type = #tpu.core_type<tc>, window_params = [{transform_indices = @transform_0, window_bounds = array<i64: 32, 32>}, {pipeline_mode = #tpu.pipeline_mode<synchronous>, transform_indices = @transform_1, window_bounds = array<i64: 32, 128>}, {transform_indices = @transform_2, window_bounds = array<i64: 32, 128>}, {pipeline_mode = #tpu.pipeline_mode<synchronous>, transform_indices = @transform_3, window_bounds = array<i64: 256, 128>}, {pipeline_mode = #tpu.pipeline_mode<synchronous>, transform_indices = @transform_4, window_bounds = array<i64: 1, 128>}, {pipeline_mode = #tpu.pipeline_mode<synchronous>, transform_indices = @transform_5, window_bounds = array<i64: 1, 128>}, {transform_indices = @transform_6, window_bounds = array<i64: 32, 128>}, {transform_indices = @transform_7, window_bounds = array<i64: 32, 1>}]} {
    %c0 = arith.constant 0 : index
    %c0_0 = arith.constant 0 : index
    %0 = vector.load %arg1[%c0, %c0_0] : memref<32x32xi8, #tpu.memory_space<vmem>>, vector<32x32xi8>
    %1 = arith.sitofp %0 : vector<32x32xi8> to vector<32x32xf32>
    %2 = arith.truncf %1 : vector<32x32xf32> to vector<32x32xbf16>
    %c0_1 = arith.constant 0 : index
    %c0_2 = arith.constant 0 : index
    %3 = vector.load %arg2[%c0_1, %c0_2] : memref<32x128xbf16, #tpu.memory_space<vmem>>, vector<32x128xbf16>
    %cst = arith.constant dense<0.000000e+00> : vector<32x128xf32>
    %4 = tpu.matmul %2, %3, %cst {dimension_numbers = #tpu.dot_dimension_numbers<[1], [0], [0], [1], [0, 0, 1, 1], [], []>} : vector<32x32xbf16>, vector<32x128xbf16>, vector<32x128xf32> -> vector<32x128xf32>
    %5 = arith.truncf %4 : vector<32x128xf32> to vector<32x128xbf16>
    %c0_3 = arith.constant 0 : index
    %c0_4 = arith.constant 0 : index
    %6 = vector.load %arg3[%c0_3, %c0_4] : memref<32x128xbf16, #tpu.memory_space<vmem>>, vector<32x128xbf16>
    %7 = tpu.concatenate %5, %6 in 1 : vector<32x128xbf16>, vector<32x128xbf16> -> vector<32x256xbf16>
    %c0_5 = arith.constant 0 : index
    %c0_6 = arith.constant 0 : index
    %8 = vector.load %arg4[%c0_5, %c0_6] : memref<256x128xbf16, #tpu.memory_space<vmem>>, vector<256x128xbf16>
    %cst_7 = arith.constant dense<0.000000e+00> : vector<32x128xf32>
    %9 = tpu.matmul %7, %8, %cst_7 {dimension_numbers = #tpu.dot_dimension_numbers<[1], [0], [0], [1], [0, 0, 1, 1], [], []>} : vector<32x256xbf16>, vector<256x128xbf16>, vector<32x128xf32> -> vector<32x128xf32>
    %c0_8 = arith.constant 0 : index
    %c0_9 = arith.constant 0 : index
    %10 = vector.load %arg5[%c0_8, %c0_9] : memref<1x128xf32, #tpu.memory_space<vmem>>, vector<1x128xf32>
    %11 = vector.broadcast %10 : vector<1x128xf32> to vector<32x128xf32>
    %12 = arith.addf %9, %11 : vector<32x128xf32>
    %cst_10 = arith.constant 0.000000e+00 : f32
    %13 = vector.broadcast %cst_10 : f32 to vector<32x128xf32>
    %14 = arith.maximumf %12, %13 : vector<32x128xf32>
    %c0_11 = arith.constant 0 : index
    %c0_12 = arith.constant 0 : index
    %15 = vector.load %arg7[%c0_11, %c0_12] : memref<32x128xf32, #tpu.memory_space<vmem>>, vector<32x128xf32>
    tpu.vector_store %arg7[%c0_11, %c0_12], %14 {strides = array<i32>} : memref<32x128xf32, #tpu.memory_space<vmem>>, vector<32x128xf32>,
    %c0_13 = arith.constant 0 : index
    %c0_14 = arith.constant 0 : index
    %16 = vector.load %arg6[%c0_13, %c0_14] : memref<1x128xf32, #tpu.memory_space<vmem>>, vector<1x128xf32>
    %17 = vector.broadcast %16 : vector<1x128xf32> to vector<32x128xf32>
    %18 = arith.mulf %14, %17 : vector<32x128xf32>
    %cst_15 = arith.constant dense<0.000000e+00> : vector<32xf32>
    %19 = vector.multi_reduction <add>, %18, %cst_15 [1] : vector<32x128xf32> to vector<32xf32>
    %20 = vector.shape_cast %19 : vector<32xf32> to vector<32x1xf32>
    %21 = math.tanh %20 : vector<32x1xf32>
    %c0_16 = arith.constant 0 : index
    %c0_17 = arith.constant 0 : index
    %22 = vector.load %arg8[%c0_16, %c0_17] : memref<32x1xf32, #tpu.memory_space<vmem>>, vector<32x1xf32>
    tpu.vector_store %arg8[%c0_16, %c0_17], %21 {strides = array<i32>} : memref<32x1xf32, #tpu.memory_space<vmem>>, vector<32x1xf32>,
    return
  }
  func.func @transform_0(%arg0: i32) -> (i32, i32) {
    %c0_i32 = arith.constant 0 : i32
    %c0_i32_0 = arith.constant 0 : i32
    return %arg0, %c0_i32 : i32, i32
  }
  func.func @transform_1(%arg0: i32) -> (i32, i32) {
    %c0_i32 = arith.constant 0 : i32
    %c0_i32_0 = arith.constant 0 : i32
    %c0_i32_1 = arith.constant 0 : i32
    return %c0_i32, %c0_i32_0 : i32, i32
  }
  func.func @transform_2(%arg0: i32) -> (i32, i32) {
    %c0_i32 = arith.constant 0 : i32
    %c0_i32_0 = arith.constant 0 : i32
    return %arg0, %c0_i32 : i32, i32
  }
  func.func @transform_3(%arg0: i32) -> (i32, i32) {
    %c0_i32 = arith.constant 0 : i32
    %c0_i32_0 = arith.constant 0 : i32
    %c0_i32_1 = arith.constant 0 : i32
    return %c0_i32, %c0_i32_0 : i32, i32
  }
  func.func @transform_4(%arg0: i32) -> (i32, i32) {
    %c0_i32 = arith.constant 0 : i32
    %c0_i32_0 = arith.constant 0 : i32
    %c0_i32_1 = arith.constant 0 : i32
    return %c0_i32, %c0_i32_0 : i32, i32
  }
  func.func @transform_5(%arg0: i32) -> (i32, i32) {
    %c0_i32 = arith.constant 0 : i32
    %c0_i32_0 = arith.constant 0 : i32
    %c0_i32_1 = arith.constant 0 : i32
    return %c0_i32, %c0_i32_0 : i32, i32
  }
  func.func @transform_6(%arg0: i32) -> (i32, i32) {
    %c0_i32 = arith.constant 0 : i32
    %c0_i32_0 = arith.constant 0 : i32
    return %arg0, %c0_i32 : i32, i32
  }
  func.func @transform_7(%arg0: i32) -> (i32, i32) {
    %c0_i32 = arith.constant 0 : i32
    %c0_i32_0 = arith.constant 0 : i32
    return %arg0, %c0_i32 : i32, i32
  }
}

module attributes {stable_mosaic.version = 11 : i64} {
  func.func @pool_readout_kernel(%arg0: memref<32x128xf32, #tpu.memory_space<vmem>>, %arg1: memref<32x1xf32, #tpu.memory_space<vmem>>, %arg2: memref<32x1xf32, #tpu.memory_space<vmem>>, %arg3: memref<2x32xf32, #tpu.memory_space<vmem>>, %arg4: memref<32x1xf32, #tpu.memory_space<vmem>>, %arg5: memref<2x256xf32, #tpu.memory_space<vmem>>, %arg6: memref<256x128xf32, #tpu.memory_space<vmem>>, %arg7: memref<1x128xf32, #tpu.memory_space<vmem>>, %arg8: memref<128x64xf32, #tpu.memory_space<vmem>>, %arg9: memref<1x64xf32, #tpu.memory_space<vmem>>, %arg10: memref<64x6xf32, #tpu.memory_space<vmem>>, %arg11: memref<1x6xf32, #tpu.memory_space<vmem>>, %arg12: memref<2x6xf32, #tpu.memory_space<vmem>>) attributes {dimension_semantics = [], scalar_prefetch = 0 : i64, scratch_operands = 0 : i64, tpu.core_type = #tpu.core_type<tc>} {
    %c0 = arith.constant 0 : index
    %c0_0 = arith.constant 0 : index
    %0 = vector.load %arg0[%c0, %c0_0] : memref<32x128xf32, #tpu.memory_space<vmem>>, vector<32x128xf32>
    %c0_1 = arith.constant 0 : index
    %c0_2 = arith.constant 0 : index
    %1 = vector.load %arg2[%c0_1, %c0_2] : memref<32x1xf32, #tpu.memory_space<vmem>>, vector<32x1xf32>
    %c0_3 = arith.constant 0 : index
    %c0_4 = arith.constant 0 : index
    %2 = vector.load %arg1[%c0_3, %c0_4] : memref<32x1xf32, #tpu.memory_space<vmem>>, vector<32x1xf32>
    %3 = vector.broadcast %2 : vector<32x1xf32> to vector<32x128xf32>
    %4 = arith.mulf %0, %3 : vector<32x128xf32>
    %c0_5 = arith.constant 0 : index
    %c0_6 = arith.constant 0 : index
    %5 = vector.load %arg3[%c0_5, %c0_6] : memref<2x32xf32, #tpu.memory_space<vmem>>, vector<2x32xf32>
    %cst = arith.constant dense<0.000000e+00> : vector<2x128xf32>
    %6 = tpu.matmul %5, %4, %cst {dimension_numbers = #tpu.dot_dimension_numbers<[1], [0], [0], [1], [0, 0, 1, 1], [], []>} : vector<2x32xf32>, vector<32x128xf32>, vector<2x128xf32> -> vector<2x128xf32>
    %cst_7 = arith.constant dense<0.000000e+00> : vector<2x1xf32>
    %7 = tpu.matmul %5, %1, %cst_7 {dimension_numbers = #tpu.dot_dimension_numbers<[1], [0], [0], [1], [0, 0, 1, 1], [], []>} : vector<2x32xf32>, vector<32x1xf32>, vector<2x1xf32> -> vector<2x1xf32>
    %cst_8 = arith.constant 1.000000e+00 : f32
    %8 = vector.broadcast %cst_8 : f32 to vector<2x1xf32>
    %9 = arith.maximumf %7, %8 : vector<2x1xf32>
    %10 = vector.broadcast %9 : vector<2x1xf32> to vector<2x128xf32>
    %11 = arith.divf %6, %10 : vector<2x128xf32>
    %cst_9 = arith.constant 5.000000e-01 : f32
    %12 = vector.broadcast %cst_9 : f32 to vector<32x1xf32>
    %13 = arith.cmpf ogt, %1, %12 : vector<32x1xf32>
    %cst_10 = arith.constant -3.000000e+38 : f32
    %14 = vector.shape_cast %13 : vector<32x1xi1> to vector<32x1xi1>
    %15 = vector.broadcast %14 : vector<32x1xi1> to vector<32x128xi1>
    %16 = vector.broadcast %cst_10 : f32 to vector<32x128xf32>
    %17 = arith.select %15, %4, %16 : vector<32x128xi1>, vector<32x128xf32>
    %18 = vector.shape_cast %17 : vector<32x128xf32> to vector<2x16x128xf32>
    %cst_11 = arith.constant dense<0xFF800000> : vector<2x128xf32>
    %19 = vector.multi_reduction <maximumf>, %18, %cst_11 [1] : vector<2x16x128xf32> to vector<2x128xf32>
    %cst_12 = arith.constant 5.000000e-01 : f32
    %20 = vector.broadcast %cst_12 : f32 to vector<2x1xf32>
    %21 = arith.cmpf ogt, %7, %20 : vector<2x1xf32>
    %cst_13 = arith.constant 0.000000e+00 : f32
    %22 = vector.shape_cast %21 : vector<2x1xi1> to vector<2x1xi1>
    %23 = vector.broadcast %22 : vector<2x1xi1> to vector<2x128xi1>
    %24 = vector.broadcast %cst_13 : f32 to vector<2x128xf32>
    %25 = arith.select %23, %19, %24 : vector<2x128xi1>, vector<2x128xf32>
    %c0_14 = arith.constant 0 : index
    %c0_15 = arith.constant 0 : index
    %26 = vector.load %arg5[%c0_14, %c0_15] : memref<2x256xf32, #tpu.memory_space<vmem>>, vector<2x128xf32>
    %27 = arith.addf %25, %26 : vector<2x128xf32>
    %c0_16 = arith.constant 0 : index
    %c128 = arith.constant 128 : index
    %28 = vector.load %arg5[%c0_16, %c128] : memref<2x256xf32, #tpu.memory_space<vmem>>, vector<2x128xf32>
    %29 = arith.addf %11, %28 : vector<2x128xf32>
    %c0_17 = arith.constant 0 : index
    %c0_18 = arith.constant 0 : index
    %30 = vector.load %arg6[%c0_17, %c0_18] : memref<256x128xf32, #tpu.memory_space<vmem>>, vector<128x128xf32>
    %cst_19 = arith.constant dense<0.000000e+00> : vector<2x128xf32>
    %31 = tpu.matmul %27, %30, %cst_19 {dimension_numbers = #tpu.dot_dimension_numbers<[1], [0], [0], [1], [0, 0, 1, 1], [], []>} : vector<2x128xf32>, vector<128x128xf32>, vector<2x128xf32> -> vector<2x128xf32>
    %c128_20 = arith.constant 128 : index
    %c0_21 = arith.constant 0 : index
    %32 = vector.load %arg6[%c128_20, %c0_21] : memref<256x128xf32, #tpu.memory_space<vmem>>, vector<128x128xf32>
    %cst_22 = arith.constant dense<0.000000e+00> : vector<2x128xf32>
    %33 = tpu.matmul %29, %32, %cst_22 {dimension_numbers = #tpu.dot_dimension_numbers<[1], [0], [0], [1], [0, 0, 1, 1], [], []>} : vector<2x128xf32>, vector<128x128xf32>, vector<2x128xf32> -> vector<2x128xf32>
    %34 = arith.addf %31, %33 : vector<2x128xf32>
    %c0_23 = arith.constant 0 : index
    %c0_24 = arith.constant 0 : index
    %35 = vector.load %arg7[%c0_23, %c0_24] : memref<1x128xf32, #tpu.memory_space<vmem>>, vector<1x128xf32>
    %36 = vector.broadcast %35 : vector<1x128xf32> to vector<2x128xf32>
    %37 = arith.addf %34, %36 : vector<2x128xf32>
    %cst_25 = arith.constant 0.000000e+00 : f32
    %38 = vector.broadcast %cst_25 : f32 to vector<2x128xf32>
    %39 = arith.maximumf %37, %38 : vector<2x128xf32>
    %c0_26 = arith.constant 0 : index
    %c0_27 = arith.constant 0 : index
    %40 = vector.load %arg8[%c0_26, %c0_27] : memref<128x64xf32, #tpu.memory_space<vmem>>, vector<128x64xf32>
    %cst_28 = arith.constant dense<0.000000e+00> : vector<2x64xf32>
    %41 = tpu.matmul %39, %40, %cst_28 {dimension_numbers = #tpu.dot_dimension_numbers<[1], [0], [0], [1], [0, 0, 1, 1], [], []>} : vector<2x128xf32>, vector<128x64xf32>, vector<2x64xf32> -> vector<2x64xf32>
    %c0_29 = arith.constant 0 : index
    %c0_30 = arith.constant 0 : index
    %42 = vector.load %arg9[%c0_29, %c0_30] : memref<1x64xf32, #tpu.memory_space<vmem>>, vector<1x64xf32>
    %43 = vector.broadcast %42 : vector<1x64xf32> to vector<2x64xf32>
    %44 = arith.addf %41, %43 : vector<2x64xf32>
    %cst_31 = arith.constant 0.000000e+00 : f32
    %45 = vector.broadcast %cst_31 : f32 to vector<2x64xf32>
    %46 = arith.maximumf %44, %45 : vector<2x64xf32>
    %c0_32 = arith.constant 0 : index
    %c0_33 = arith.constant 0 : index
    %47 = vector.load %arg10[%c0_32, %c0_33] : memref<64x6xf32, #tpu.memory_space<vmem>>, vector<64x6xf32>
    %cst_34 = arith.constant dense<0.000000e+00> : vector<2x6xf32>
    %48 = tpu.matmul %46, %47, %cst_34 {dimension_numbers = #tpu.dot_dimension_numbers<[1], [0], [0], [1], [0, 0, 1, 1], [], []>} : vector<2x64xf32>, vector<64x6xf32>, vector<2x6xf32> -> vector<2x6xf32>
    %c0_35 = arith.constant 0 : index
    %c0_36 = arith.constant 0 : index
    %49 = vector.load %arg11[%c0_35, %c0_36] : memref<1x6xf32, #tpu.memory_space<vmem>>, vector<1x6xf32>
    %50 = vector.broadcast %49 : vector<1x6xf32> to vector<2x6xf32>
    %51 = arith.addf %48, %50 : vector<2x6xf32>
    %cst_37 = arith.constant dense<0xFF800000> : vector<2xf32>
    %52 = vector.multi_reduction <maximumf>, %51, %cst_37 [1] : vector<2x6xf32> to vector<2xf32>
    %53 = vector.shape_cast %52 : vector<2xf32> to vector<2x1xf32>
    %54 = vector.broadcast %53 : vector<2x1xf32> to vector<2x6xf32>
    %55 = arith.subf %51, %54 : vector<2x6xf32>
    %56 = math.exp %55 : vector<2x6xf32>
    %cst_38 = arith.constant dense<0.000000e+00> : vector<2xf32>
    %57 = vector.multi_reduction <add>, %56, %cst_38 [1] : vector<2x6xf32> to vector<2xf32>
    %58 = vector.shape_cast %57 : vector<2xf32> to vector<2x1xf32>
    %59 = math.log %58 : vector<2x1xf32>
    %60 = arith.addf %59, %53 : vector<2x1xf32>
    %61 = vector.broadcast %60 : vector<2x1xf32> to vector<2x6xf32>
    %62 = arith.subf %51, %61 : vector<2x6xf32>
    %c0_39 = arith.constant 0 : index
    %c0_40 = arith.constant 0 : index
    %63 = vector.load %arg12[%c0_39, %c0_40] : memref<2x6xf32, #tpu.memory_space<vmem>>, vector<2x6xf32>
    tpu.vector_store %arg12[%c0_39, %c0_40], %62 {strides = array<i32>} : memref<2x6xf32, #tpu.memory_space<vmem>>, vector<2x6xf32>,
    return
  }
}

</mosaic_0001>

<llo_original>
// kernel: mul.23
$region0: #{mul.23}
  #allocation0 [shape = 's32[1]{0}', space=sflag, size = 0x4, scoped, tag = 'scoped memory for mul.23']
  %s0 = inlined_call_operand.vmem [shape: f32[32,1], index: 0, kind: input, shape index: {}]
  %s1 = inlined_call_operand.vmem [shape: f32[32,1], index: 1, kind: input, shape index: {}]
  %s2 = inlined_call_operand.vmem [shape: f32[32,1], index: 2, kind: output, shape index: {}]
  %v3 = vld [vmem:[%s0] sm:$0xff]
  %v4 = vld [vmem:[%s1] sm:$0xff]
  %5 = xla_tuple %v3, %v4
  %6 = xla_tuple %5
  %v7 = vmul.f32 %v3, %v4
  %8 = xla_tuple %v7
  %9 = vst [vmem:[%s2] sm:$0xff] %v7
  %s10 = scalar_lea.vmem %s0, 8
  %v11 = vld [vmem:[%s10] sm:$0xff]
  %s12 = scalar_lea.vmem %s1, 8
  %v13 = vld [vmem:[%s12] sm:$0xff]
  %14 = xla_tuple %v11, %v13
  %15 = xla_tuple %14
  %v16 = vmul.f32 %v11, %v13
  %17 = xla_tuple %v16
  %s18 = scalar_lea.vmem %s2, 8
  %19 = vst [vmem:[%s18] sm:$0xff] %v16
  %s20 = scalar_lea.vmem %s0, 16
  %v21 = vld [vmem:[%s20] sm:$0xff]
  %s22 = scalar_lea.vmem %s1, 16
  %v23 = vld [vmem:[%s22] sm:$0xff]
  %24 = xla_tuple %v21, %v23
  %25 = xla_tuple %24
  %v26 = vmul.f32 %v21, %v23
  %27 = xla_tuple %v26
  %s28 = scalar_lea.vmem %s2, 16
  %29 = vst [vmem:[%s28] sm:$0xff] %v26
  %s30 = scalar_lea.vmem %s0, 24
  %v31 = vld [vmem:[%s30] sm:$0xff]
  %s32 = scalar_lea.vmem %s1, 24
  %v33 = vld [vmem:[%s32] sm:$0xff]
  %34 = xla_tuple %v31, %v33
  %35 = xla_tuple %34
  %v36 = vmul.f32 %v31, %v33
  %37 = xla_tuple %v36
  %s38 = scalar_lea.vmem %s2, 24
  %39 = vst [vmem:[%s38] sm:$0xff] %v36

// kernel: topkpool_forward.6
$region0: #{topkpool_forward.6}
  #allocation0 [shape = 'u32[]', space=smem, size = 0x4, offset = 0x4, fixed_abs, tag = 'smem constant byte address 0x4 - core index']
  #allocation1 [shape = 'u32[72,128]{1,0:T(1,128)}', space=vmem, size = 0x9000, scoped, tag = 'internal scratch']
  %s0 = inlined_call_operand.vmem [shape: s8[32,32], index: 0, kind: input, shape index: {}]
  %s1 = inlined_call_operand.vmem [shape: bf16[32,128], index: 1, kind: input, shape index: {}]
  %s2 = inlined_call_operand.vmem [shape: f32[32,128], index: 2, kind: input, shape index: {}]
  %s3 = inlined_call_operand.vmem [shape: f32[1,128], index: 3, kind: input, shape index: {}]
  %s4 = inlined_call_operand.vmem [shape: f32[32,128], index: 4, kind: output, shape index: {0}]
  %s5 = inlined_call_operand.vmem [shape: f32[32,1], index: 5, kind: output, shape index: {1}]
  %6 = xla_tuple %s4, %s5
  %s7 = sld [smem:[#allocation0]]
  $region34: #{topkpool_forward.6} parent=0
    _
  %s9 = ssub.s32 1, %s7
  %s10 = scalar_select 0, %s9, %s7
  // Predicated region
  $region2: #{topkpool_forward.6} parent=0 // pred_check
    _
  $region3: #{topkpool_forward.6} parent=0 // pred_check_branch
    %12 = sbr.rel (0) target = $region5
  $region4: #{topkpool_forward.6} parent=0 // pred_region
    _
  $region5: #{topkpool_forward.6} parent=0 // pred_fallthru
    _
  // Predicated region
  $region6: #{topkpool_forward.6} parent=0 // pred_check
    _
  $region7: #{topkpool_forward.6} parent=0 // pred_check_branch
    %14 = sbr.rel (0) target = $region9
  $region8: #{topkpool_forward.6} parent=0 // pred_region
    _
  $region9: #{topkpool_forward.6} parent=0 // pred_fallthru
    _
  // Predicated region
  $region10: #{topkpool_forward.6} parent=0 // pred_check
    _
  $region11: #{topkpool_forward.6} parent=0 // pred_check_branch
    %16 = sbr.rel (0) target = $region13
  $region12: #{topkpool_forward.6} parent=0 // pred_region
    _
  $region13: #{topkpool_forward.6} parent=0 // pred_fallthru
    _
  // Predicated region
  $region14: #{topkpool_forward.6} parent=0 // pred_check
    _
  $region15: #{topkpool_forward.6} parent=0 // pred_check_branch
    %18 = sbr.rel (0) target = $region17
  $region16: #{topkpool_forward.6} parent=0 // pred_region
    _
  $region17: #{topkpool_forward.6} parent=0 // pred_fallthru
    _
  %v20 = vld [vmem:[%s0] sm:$0xff]
  %v21 = vunpack.c.0.s8 %v20
  %v22 = vunpack.c.1.s8 %v20
  %v23 = vunpack.c.2.s8 %v20
  %v24 = vunpack.c.3.s8 %v20
  %v25 = vcvt.s32.f32 %v21
  %v26 = vcvt.s32.f32 %v22
  %v27 = vcvt.s32.f32 %v23
  %v28 = vcvt.s32.f32 %v24
  %v29 = vpack.c.bf16 %v26, %v25
  %v30 = vpack.c.bf16 %v28, %v27
  %v31 = vld [vmem:[%s1] sm:$0xf]
  %v32 = vld [vmem:[%s1 + $0x4] sm:$0xf]
  %v33 = vld [vmem:[%s1 + $0x8] sm:$0xf]
  %v34 = vld [vmem:[%s1 + $0xc] sm:$0xf]
  %v35 = vld [vmem:[%s2] sm:$0xff]
  %v36 = vld [vmem:[%s2 + $0x8] sm:$0xff]
  %v37 = vld [vmem:[%s2 + $0x10] sm:$0xff]
  %v38 = vld [vmem:[%s2 + $0x18] sm:$0xff]
  %v43 = vunpack.c.l.b16 %v31
  %v44 = vunpack.c.l.b16 %v32
  %v45 = vunpack.c.l.b16 %v33
  %v46 = vunpack.c.l.b16 %v34
  %v47 = vpack.c.b16 %v44, %v43
  %v48 = vpack.c.b16 %v46, %v45
  %vm51 = vcmask 261120
  %v53 = vsel %vm51, %v29, 0
  %v56 = vsel %vm51, %v30, 0
  %58 = vmatpush.bf16.msra.mxu0 0
  %59 = vmatpush.bf16.msra.mxu0 0
  %60 = vmatpush.bf16.msra.mxu0 0
  %61 = vmatpush.bf16.msra.mxu0 0
  %62 = vmatpush.bf16.msra.mxu0 0
  %63 = vmatpush.bf16.msra.mxu0 0
  %64 = vmatpush.bf16.msra.mxu0 %v48
  %65 = vmatpush.bf16.msra.mxu0 %v47
  %66 = vmatmul.bf16.gmra.mxu0 %v53
  %v67 = vpop.f32.mrf.mxu0
  %v68 = vadd.f32 %v35, %v67
  %v69 = vpop.f32.mrf.mxu0
  %v70 = vadd.f32 %v36, %v69
  %71 = vmatmul.bf16.gmra.mxu0 %v56
  %v72 = vpop.f32.mrf.mxu0
  %v73 = vadd.f32 %v37, %v72
  %v74 = vpop.f32.mrf.mxu0
  %v75 = vadd.f32 %v38, %v74
  %76 = vdwg.mxu0
  %v77 = vmax.f32 %v68, 0.0
  %v78 = vmax.f32 %v70, 0.0
  %v79 = vmax.f32 %v73, 0.0
  %v80 = vmax.f32 %v75, 0.0
  %81 = vst [vmem:[%s4] sm:$0xff] %v77
  %82 = vst [vmem:[%s4 + $0x8] sm:$0xff] %v78
  %83 = vst [vmem:[%s4 + $0x10] sm:$0xff] %v79
  %84 = vst [vmem:[%s4 + $0x18] sm:$0xff] %v80
  %v85 = vld [vmem:[%s3] sm:$0x1]
  %v87 = vperm.slane %v85, 0
  %v89 = vmul.f32 %v77, %v87
  %v90 = vmul.f32 %v78, %v87
  %v91 = vmul.f32 %v79, %v87
  %v92 = vmul.f32 %v80, %v87
  %93 = vadd.xlane.f32.xlu0 %v89
  %v94 = vpop.xlane.xlu0 %93
  %95 = vadd.xlane.f32.xlu0 %v90
  %v96 = vpop.xlane.xlu0 %95
  %97 = vadd.xlane.f32.xlu0 %v91
  %v98 = vpop.xlane.xlu0 %97
  %99 = vadd.xlane.f32.xlu0 %v92
  %v100 = vpop.xlane.xlu0 %99
  %v101 = vtanh.pop %v94
  %v102 = vtanh.pop %v96
  %v103 = vtanh.pop %v98
  %v104 = vtanh.pop %v100
  %vm105 = vcmask 7168
  %106 = vst.msk [vmem:[%s5] sm:$0xff] %vm105, %v101
  %107 = vst.msk [vmem:[%s5 + $0x8] sm:$0xff] %vm105, %v102
  %108 = vst.msk [vmem:[%s5 + $0x10] sm:$0xff] %vm105, %v103
  %109 = vst.msk [vmem:[%s5 + $0x18] sm:$0xff] %vm105, %v104
  // Predicated region
  $region18: #{topkpool_forward.6} parent=0 // pred_check
    _
  $region19: #{topkpool_forward.6} parent=0 // pred_check_branch
    %111 = sbr.rel (0) target = $region21
  $region20: #{topkpool_forward.6} parent=0 // pred_region
    _
  $region21: #{topkpool_forward.6} parent=0 // pred_fallthru
    _
  // Predicated region
  $region22: #{topkpool_forward.6} parent=0 // pred_check
    _
  $region23: #{topkpool_forward.6} parent=0 // pred_check_branch
    %113 = sbr.rel (0) target = $region25
  $region24: #{topkpool_forward.6} parent=0 // pred_region
    _
  $region25: #{topkpool_forward.6} parent=0 // pred_fallthru
    _
  // Predicated region
  $region26: #{topkpool_forward.6} parent=0 // pred_check
    _
  $region27: #{topkpool_forward.6} parent=0 // pred_check_branch
    %115 = sbr.rel (0) target = $region29
  $region28: #{topkpool_forward.6} parent=0 // pred_region
    _
  $region29: #{topkpool_forward.6} parent=0 // pred_fallthru
    _
  // Predicated region
  $region30: #{topkpool_forward.6} parent=0 // pred_check
    _
  $region31: #{topkpool_forward.6} parent=0 // pred_check_branch
    %117 = sbr.rel (0) target = $region33
  $region32: #{topkpool_forward.6} parent=0 // pred_region
    _
  $region33: #{topkpool_forward.6} parent=0 // pred_fallthru
    _

// kernel: topkpool_forward.7
$region0: #{topkpool_forward.7}
  #allocation0 [shape = 'u32[]', space=smem, size = 0x4, offset = 0x4, fixed_abs, tag = 'smem constant byte address 0x4 - core index']
  #allocation1 [shape = 'u32[72,128]{1,0:T(1,128)}', space=vmem, size = 0x9000, scoped, tag = 'internal scratch']
  %s0 = inlined_call_operand.vmem [shape: f32[32,128], index: 0, kind: input, shape index: {}]
  %s1 = inlined_call_operand.vmem [shape: f32[32,1], index: 1, kind: input, shape index: {}]
  %s2 = inlined_call_operand.vmem [shape: f32[32,1], index: 2, kind: input, shape index: {}]
  %s3 = inlined_call_operand.vmem [shape: f32[2,32], index: 3, kind: input, shape index: {}]
  %s4 = inlined_call_operand.vmem [shape: f32[32,1], index: 4, kind: input, shape index: {}]
  %s5 = inlined_call_operand.vmem [shape: f32[2,256], index: 5, kind: output, shape index: {0}]
  %s6 = inlined_call_operand.vmem [shape: bf16[32,128], index: 6, kind: output, shape index: {1}]
  %7 = xla_tuple %s5, %s6
  %s8 = sld [smem:[#allocation0]]
  $region38: #{topkpool_forward.7} parent=0
    _
  %s10 = ssub.s32 1, %s8
  %s11 = scalar_select 0, %s10, %s8
  // Predicated region
  $region2: #{topkpool_forward.7} parent=0 // pred_check
    _
  $region3: #{topkpool_forward.7} parent=0 // pred_check_branch
    %13 = sbr.rel (0) target = $region5
  $region4: #{topkpool_forward.7} parent=0 // pred_region
    _
  $region5: #{topkpool_forward.7} parent=0 // pred_fallthru
    _
  // Predicated region
  $region6: #{topkpool_forward.7} parent=0 // pred_check
    _
  $region7: #{topkpool_forward.7} parent=0 // pred_check_branch
    %15 = sbr.rel (0) target = $region9
  $region8: #{topkpool_forward.7} parent=0 // pred_region
    _
  $region9: #{topkpool_forward.7} parent=0 // pred_fallthru
    _
  // Predicated region
  $region10: #{topkpool_forward.7} parent=0 // pred_check
    _
  $region11: #{topkpool_forward.7} parent=0 // pred_check_branch
    %17 = sbr.rel (0) target = $region13
  $region12: #{topkpool_forward.7} parent=0 // pred_region
    _
  $region13: #{topkpool_forward.7} parent=0 // pred_fallthru
    _
  // Predicated region
  $region14: #{topkpool_forward.7} parent=0 // pred_check
    _
  $region15: #{topkpool_forward.7} parent=0 // pred_check_branch
    %19 = sbr.rel (0) target = $region17
  $region16: #{topkpool_forward.7} parent=0 // pred_region
    _
  $region17: #{topkpool_forward.7} parent=0 // pred_fallthru
    _
  // Predicated region
  $region18: #{topkpool_forward.7} parent=0 // pred_check
    _
  $region19: #{topkpool_forward.7} parent=0 // pred_check_branch
    %21 = sbr.rel (0) target = $region21
  $region20: #{topkpool_forward.7} parent=0 // pred_region
    _
  $region21: #{topkpool_forward.7} parent=0 // pred_fallthru
    _
  %v22 = vld [vmem:[%s0] sm:$0xff]
  %v23 = vld [vmem:[%s0 + $0x8] sm:$0xff]
  %v24 = vld [vmem:[%s0 + $0x10] sm:$0xff]
  %v25 = vld [vmem:[%s0 + $0x18] sm:$0xff]
  %v26 = vld [vmem:[%s2] sm:$0xff]
  %v27 = vld [vmem:[%s2 + $0x8] sm:$0xff]
  %v28 = vld [vmem:[%s2 + $0x10] sm:$0xff]
  %v29 = vld [vmem:[%s2 + $0x18] sm:$0xff]
  %v30 = vld [vmem:[%s1] sm:$0xff]
  %v31 = vld [vmem:[%s1 + $0x8] sm:$0xff]
  %v32 = vld [vmem:[%s1 + $0x10] sm:$0xff]
  %v33 = vld [vmem:[%s1 + $0x18] sm:$0xff]
  %35 = vset.pattern.permute.xlu0 0
  %36 = vperm.xlu0 %35, %v30
  %v37 = vpop.permute.xlu0 %36
  %40 = vset.pattern.permute.xlu0 0
  %41 = vperm.xlu0 %40, %v31
  %v42 = vpop.permute.xlu0 %41
  %45 = vset.pattern.permute.xlu0 0
  %46 = vperm.xlu0 %45, %v32
  %v47 = vpop.permute.xlu0 %46
  %50 = vset.pattern.permute.xlu0 0
  %51 = vperm.xlu0 %50, %v33
  %v52 = vpop.permute.xlu0 %51
  %v54 = vmul.f32 %v22, %v37
  %v55 = vmul.f32 %v23, %v42
  %v56 = vmul.f32 %v24, %v47
  %v57 = vmul.f32 %v25, %v52
  %v58 = vld [vmem:[%s3] sm:$0x3]
  %vm59 = vcmask 261120
  %v61 = vsel %vm59, %v58, 0
  %63 = vmatpush.msra.mxu0 0.0
  %64 = vmatpush.msra.mxu0 0.0
  %65 = vmatpush.msra.mxu0 0.0
  %66 = vmatpush.msra.mxu0 0.0
  %67 = vmatpush.msra.mxu0 0.0
  %68 = vmatpush.msra.mxu0 0.0
  %69 = vmatpush.msra.mxu0 0.0
  %70 = vmatpush.msra.mxu0 0.0
  %71 = vmatpush.msra.mxu0 0.0
  %72 = vmatpush.msra.mxu0 0.0
  %73 = vmatpush.msra.mxu0 0.0
  %74 = vmatpush.msra.mxu0 0.0
  %75 = vmatpush.msra.mxu0 %v57
  %76 = vmatpush.msra.mxu0 %v56
  %77 = vmatpush.msra.mxu0 %v55
  %78 = vmatpush.msra.mxu0 %v54
  %79 = vmatmul.f32.gmra.mxu0 %v61
  %v80 = vpop.f32.mrf.mxu0
  %v81 = vadd.f32 0.0, %v80
  %82 = vdwg.mxu0
  %83 = vmatpush.msra.mxu0 0.0
  %84 = vmatpush.msra.mxu0 0.0
  %85 = vmatpush.msra.mxu0 0.0
  %86 = vmatpush.msra.mxu0 0.0
  %87 = vmatpush.msra.mxu0 0.0
  %88 = vmatpush.msra.mxu0 0.0
  %89 = vmatpush.msra.mxu0 0.0
  %90 = vmatpush.msra.mxu0 0.0
  %91 = vmatpush.msra.mxu0 0.0
  %92 = vmatpush.msra.mxu0 0.0
  %93 = vmatpush.msra.mxu0 0.0
  %94 = vmatpush.msra.mxu0 0.0
  %95 = vmatpush.msra.mxu0 %v29
  %96 = vmatpush.msra.mxu0 %v28
  %97 = vmatpush.msra.mxu0 %v27
  %98 = vmatpush.msra.mxu0 %v26
  %99 = vmatmul.f32.gmra.mxu0 %v61
  %v100 = vpop.f32.mrf.mxu0
  %v101 = vadd.f32 0.0, %v100
  %102 = vdwg.mxu0
  %v103 = vmax.f32 %v101, 1.0
  %105 = vset.pattern.permute.xlu0 0
  %106 = vperm.xlu0 %105, %v103
  %v107 = vpop.permute.xlu0 %106
  %v109 = vrcp.pop %v107
  %v110 = vmul.f32 %v107, %v109
  %v111 = vsub.f32 1.0, %v110
  %v112 = vmul.f32 %v109, %v111
  %v113 = vadd.f32 %v109, %v112
  %vm114 = vweird.f32 %v107
  %vm115 = vweird.f32 %v109
  %vm116 = vmor %vm114, %vm115
  %v117 = vsel %vm116, %v109, %v113
  %v118 = vand.u32 2147483647, %v107
  %vm119 = vcmp.eq.f32.partialorder %v118, 8.507059e+37
  %v120 = vand.u32 %v107, 2147483648
  %v121 = vor.u32 1.1754944e-38, %v120
  %v122 = vsel %vm119, %v121, %v117
  %v123 = vmul.f32 %v81, %v122
  %vm124 = vcmp.gt.f32.partialorder %v26, 0.5
  %vm125 = vcmp.gt.f32.partialorder %v27, 0.5
  %vm126 = vcmp.gt.f32.partialorder %v28, 0.5
  %vm127 = vcmp.gt.f32.partialorder %v29, 0.5
  %v128 = vsel %vm124, 1, 0
  %v129 = vsel %vm125, 1, 0
  %v130 = vsel %vm126, 1, 0
  %v131 = vsel %vm127, 1, 0
  %132 = vset.pattern.permute.xlu0 0
  %133 = vperm.xlu0 %132, %v128
  %v134 = vpop.permute.xlu0 %133
  %135 = vset.pattern.permute.xlu0 0
  %136 = vperm.xlu0 %135, %v129
  %v137 = vpop.permute.xlu0 %136
  %138 = vset.pattern.permute.xlu0 0
  %139 = vperm.xlu0 %138, %v130
  %v140 = vpop.permute.xlu0 %139
  %141 = vset.pattern.permute.xlu0 0
  %142 = vperm.xlu0 %141, %v131
  %v143 = vpop.permute.xlu0 %142
  %vm144 = vcmp.eq.s32.totalorder %v134, 1
  %vm145 = vcmp.eq.s32.totalorder %v137, 1
  %vm146 = vcmp.eq.s32.totalorder %v140, 1
  %vm147 = vcmp.eq.s32.totalorder %v143, 1
  %v148 = vsel %vm144, %v54, -3e+38
  %v149 = vsel %vm145, %v55, -3e+38
  %v150 = vsel %vm146, %v56, -3e+38
  %v151 = vsel %vm147, %v57, -3e+38
  %v152 = vmax.f32 %v148, %v149
  %v153 = vrot.slane %v152, 4
  %v154 = vmax.f32 %v152, %v153
  %v155 = vrot.slane %v154, 2
  %v156 = vmax.f32 %v154, %v155
  %v157 = vrot.slane %v156, 1
  %v158 = vmax.f32 %v156, %v157
  %v159 = vmax.f32 %v150, %v151
  %v160 = vrot.slane %v159, 4
  %v161 = vmax.f32 %v159, %v160
  %v162 = vrot.slane %v161, 2
  %v163 = vmax.f32 %v161, %v162
  %v164 = vrot.slane %v163, 1
  %v165 = vmax.f32 %v163, %v164
  %vm166 = vcmp.gt.f32.partialorder %v101, 0.5
  %v167 = vsel %vm166, 1, 0
  %168 = vset.pattern.permute.xlu0 0
  %169 = vperm.xlu0 %168, %v167
  %v170 = vpop.permute.xlu0 %169
  %vm171 = vcmp.eq.s32.totalorder %v170, 1
  %vm174 = vcmask 1041409
  %v175 = vsel %vm174, %v165, %v158
  %v177 = vsel %vm171, %v175, 0.0
  %178 = vst [vmem:[%s5] sm:$0x3] %v177
  %179 = vst [vmem:[%s5 + $0x2] sm:$0x3] %v123
  %v180 = vpack.c.bf16 %v54, %v54
  %v181 = vpack.c.bf16 %v55, %v55
  %v182 = vpack.c.bf16 %v56, %v56
  %v183 = vpack.c.bf16 %v57, %v57
  %184 = vst [vmem:[%s6] sm:$0xf] %v180
  %185 = vst [vmem:[%s6 + $0x4] sm:$0xf] %v181
  %186 = vst [vmem:[%s6 + $0x8] sm:$0xf] %v182
  %187 = vst [vmem:[%s6 + $0xc] sm:$0xf] %v183
  // Predicated region
  $region22: #{topkpool_forward.7} parent=0 // pred_check
    _
  $region23: #{topkpool_forward.7} parent=0 // pred_check_branch
    %189 = sbr.rel (0) target = $region25
  $region24: #{topkpool_forward.7} parent=0 // pred_region
    _
  $region25: #{topkpool_forward.7} parent=0 // pred_fallthru
    _
  // Predicated region
  $region26: #{topkpool_forward.7} parent=0 // pred_check
    _
  $region27: #{topkpool_forward.7} parent=0 // pred_check_branch
    %191 = sbr.rel (0) target = $region29
  $region28: #{topkpool_forward.7} parent=0 // pred_region
    _
  $region29: #{topkpool_forward.7} parent=0 // pred_fallthru
    _
  // Predicated region
  $region30: #{topkpool_forward.7} parent=0 // pred_check
    _
  $region31: #{topkpool_forward.7} parent=0 // pred_check_branch
    %193 = sbr.rel (0) target = $region33
  $region32: #{topkpool_forward.7} parent=0 // pred_region
    _
  $region33: #{topkpool_forward.7} parent=0 // pred_fallthru
    _
  // Predicated region
  $region34: #{topkpool_forward.7} parent=0 // pred_check
    _
  $region35: #{topkpool_forward.7} parent=0 // pred_check_branch
    %195 = sbr.rel (0) target = $region37
  $region36: #{topkpool_forward.7} parent=0 // pred_region
    _
  $region37: #{topkpool_forward.7} parent=0 // pred_fallthru
    _

// kernel: topkpool_forward.8
$region0: #{topkpool_forward.8}
  #allocation0 [shape = 'u32[]', space=smem, size = 0x4, offset = 0x4, fixed_abs, tag = 'smem constant byte address 0x4 - core index']
  #allocation1 [shape = 'u32[72,128]{1,0:T(1,128)}', space=vmem, size = 0x9000, scoped, tag = 'internal scratch']
  %s0 = inlined_call_operand.vmem [shape: s8[32,32], index: 0, kind: input, shape index: {}]
  %s1 = inlined_call_operand.vmem [shape: bf16[32,128], index: 1, kind: input, shape index: {}, may-alias: {1,2}]
  %s2 = inlined_call_operand.vmem [shape: bf16[32,128], index: 2, kind: input, shape index: {}, may-alias: {1,2}]
  %s3 = inlined_call_operand.vmem [shape: bf16[256,128], index: 3, kind: input, shape index: {}]
  %s4 = inlined_call_operand.vmem [shape: f32[1,128], index: 4, kind: input, shape index: {}]
  %s5 = inlined_call_operand.vmem [shape: f32[1,128], index: 5, kind: input, shape index: {}]
  %s6 = inlined_call_operand.vmem [shape: f32[32,128], index: 6, kind: output, shape index: {0}]
  %s7 = inlined_call_operand.vmem [shape: f32[32,1], index: 7, kind: output, shape index: {1}]
  %8 = xla_tuple %s6, %s7
  %s9 = sld [smem:[#allocation0]]
  $region42: #{topkpool_forward.8} parent=0
    _
  %s11 = ssub.s32 1, %s9
  %s12 = scalar_select 0, %s11, %s9
  // Predicated region
  $region2: #{topkpool_forward.8} parent=0 // pred_check
    _
  $region3: #{topkpool_forward.8} parent=0 // pred_check_branch
    %14 = sbr.rel (0) target = $region5
  $region4: #{topkpool_forward.8} parent=0 // pred_region
    _
  $region5: #{topkpool_forward.8} parent=0 // pred_fallthru
    _
  // Predicated region
  $region6: #{topkpool_forward.8} parent=0 // pred_check
    _
  $region7: #{topkpool_forward.8} parent=0 // pred_check_branch
    %16 = sbr.rel (0) target = $region9
  $region8: #{topkpool_forward.8} parent=0 // pred_region
    _
  $region9: #{topkpool_forward.8} parent=0 // pred_fallthru
    _
  // Predicated region
  $region10: #{topkpool_forward.8} parent=0 // pred_check
    _
  $region11: #{topkpool_forward.8} parent=0 // pred_check_branch
    %18 = sbr.rel (0) target = $region13
  $region12: #{topkpool_forward.8} parent=0 // pred_region
    _
  $region13: #{topkpool_forward.8} parent=0 // pred_fallthru
    _
  // Predicated region
  $region14: #{topkpool_forward.8} parent=0 // pred_check
    _
  $region15: #{topkpool_forward.8} parent=0 // pred_check_branch
    %20 = sbr.rel (0) target = $region17
  $region16: #{topkpool_forward.8} parent=0 // pred_region
    _
  $region17: #{topkpool_forward.8} parent=0 // pred_fallthru
    _
  // Predicated region
  $region18: #{topkpool_forward.8} parent=0 // pred_check
    _
  $region19: #{topkpool_forward.8} parent=0 // pred_check_branch
    %22 = sbr.rel (0) target = $region21
  $region20: #{topkpool_forward.8} parent=0 // pred_region
    _
  $region21: #{topkpool_forward.8} parent=0 // pred_fallthru
    _
  // Predicated region
  $region22: #{topkpool_forward.8} parent=0 // pred_check
    _
  $region23: #{topkpool_forward.8} parent=0 // pred_check_branch
    %24 = sbr.rel (0) target = $region25
  $region24: #{topkpool_forward.8} parent=0 // pred_region
    _
  $region25: #{topkpool_forward.8} parent=0 // pred_fallthru
    _
  %v26 = vld [vmem:[%s0] sm:$0xff]
  %v27 = vunpack.c.0.s8 %v26
  %v28 = vunpack.c.1.s8 %v26
  %v29 = vunpack.c.2.s8 %v26
  %v30 = vunpack.c.3.s8 %v26
  %v31 = vcvt.s32.f32 %v27
  %v32 = vcvt.s32.f32 %v28
  %v33 = vcvt.s32.f32 %v29
  %v34 = vcvt.s32.f32 %v30
  %v35 = vpack.c.bf16 %v32, %v31
  %v36 = vpack.c.bf16 %v34, %v33
  %v37 = vld [vmem:[%s1] sm:$0xf]
  %v38 = vld [vmem:[%s1 + $0x4] sm:$0xf]
  %v39 = vld [vmem:[%s1 + $0x8] sm:$0xf]
  %v40 = vld [vmem:[%s1 + $0xc] sm:$0xf]
  %v45 = vunpack.c.l.b16 %v37
  %v46 = vunpack.c.l.b16 %v38
  %v47 = vunpack.c.l.b16 %v39
  %v48 = vunpack.c.l.b16 %v40
  %v49 = vpack.c.b16 %v46, %v45
  %v50 = vpack.c.b16 %v48, %v47
  %vm53 = vcmask 261120
  %v55 = vsel %vm53, %v35, 0
  %v58 = vsel %vm53, %v36, 0
  %60 = vmatpush.bf16.msra.mxu0 0
  %61 = vmatpush.bf16.msra.mxu0 0
  %62 = vmatpush.bf16.msra.mxu0 0
  %63 = vmatpush.bf16.msra.mxu0 0
  %64 = vmatpush.bf16.msra.mxu0 0
  %65 = vmatpush.bf16.msra.mxu0 0
  %66 = vmatpush.bf16.msra.mxu0 %v50
  %67 = vmatpush.bf16.msra.mxu0 %v49
  %68 = vmatmul.bf16.gmra.mxu0 %v55
  %v69 = vpop.f32.mrf.mxu0
  %v70 = vadd.f32 0.0, %v69
  %v71 = vpop.f32.mrf.mxu0
  %v72 = vadd.f32 0.0, %v71
  %73 = vmatmul.bf16.gmra.mxu0 %v58
  %v74 = vpop.f32.mrf.mxu0
  %v75 = vadd.f32 0.0, %v74
  %v76 = vpop.f32.mrf.mxu0
  %v77 = vadd.f32 0.0, %v76
  %78 = vdwg.mxu0
  %v79 = vpack.c.bf16 %v70, %v70
  %v80 = vpack.c.bf16 %v72, %v72
  %v81 = vpack.c.bf16 %v75, %v75
  %v82 = vpack.c.bf16 %v77, %v77
  %v83 = vld [vmem:[%s2] sm:$0xf]
  %v84 = vld [vmem:[%s2 + $0x4] sm:$0xf]
  %v85 = vld [vmem:[%s2 + $0x8] sm:$0xf]
  %v86 = vld [vmem:[%s2 + $0xc] sm:$0xf]
  %v91 = vunpack.c.l.b16 %v79
  %v92 = vunpack.c.l.b16 %v80
  %v93 = vunpack.c.l.b16 %v81
  %v94 = vunpack.c.l.b16 %v82
  %v95 = vpack.c.b16 %v92, %v91
  %v96 = vpack.c.b16 %v94, %v93
  %v103 = vunpack.c.l.b16 %v83
  %v104 = vunpack.c.l.b16 %v84
  %v105 = vunpack.c.l.b16 %v85
  %v106 = vunpack.c.l.b16 %v86
  %v107 = vpack.c.b16 %v104, %v103
  %v108 = vpack.c.b16 %v106, %v105
  %v111 = vld [vmem:[%s3] sm:$0xf]
  %v112 = vld [vmem:[%s3 + $0x4] sm:$0xf]
  %v113 = vld [vmem:[%s3 + $0x8] sm:$0xf]
  %v114 = vld [vmem:[%s3 + $0xc] sm:$0xf]
  %v115 = vld [vmem:[%s3 + $0x10] sm:$0xf]
  %v116 = vld [vmem:[%s3 + $0x14] sm:$0xf]
  %v117 = vld [vmem:[%s3 + $0x18] sm:$0xf]
  %v118 = vld [vmem:[%s3 + $0x1c] sm:$0xf]
  %v119 = vld [vmem:[%s3 + $0x20] sm:$0xf]
  %v120 = vld [vmem:[%s3 + $0x24] sm:$0xf]
  %v121 = vld [vmem:[%s3 + $0x28] sm:$0xf]
  %v122 = vld [vmem:[%s3 + $0x2c] sm:$0xf]
  %v123 = vld [vmem:[%s3 + $0x30] sm:$0xf]
  %v124 = vld [vmem:[%s3 + $0x34] sm:$0xf]
  %v125 = vld [vmem:[%s3 + $0x38] sm:$0xf]
  %v126 = vld [vmem:[%s3 + $0x3c] sm:$0xf]
  %v127 = vld [vmem:[%s3 + $0x40] sm:$0xf]
  %v128 = vld [vmem:[%s3 + $0x44] sm:$0xf]
  %v129 = vld [vmem:[%s3 + $0x48] sm:$0xf]
  %v130 = vld [vmem:[%s3 + $0x4c] sm:$0xf]
  %v131 = vld [vmem:[%s3 + $0x50] sm:$0xf]
  %v132 = vld [vmem:[%s3 + $0x54] sm:$0xf]
  %v133 = vld [vmem:[%s3 + $0x58] sm:$0xf]
  %v134 = vld [vmem:[%s3 + $0x5c] sm:$0xf]
  %v135 = vld [vmem:[%s3 + $0x60] sm:$0xf]
  %v136 = vld [vmem:[%s3 + $0x64] sm:$0xf]
  %v137 = vld [vmem:[%s3 + $0x68] sm:$0xf]
  %v138 = vld [vmem:[%s3 + $0x6c] sm:$0xf]
  %v139 = vld [vmem:[%s3 + $0x70] sm:$0xf]
  %v140 = vld [vmem:[%s3 + $0x74] sm:$0xf]
  %v141 = vld [vmem:[%s3 + $0x78] sm:$0xf]
  %v142 = vld [vmem:[%s3 + $0x7c] sm:$0xf]
  %v143 = vld [vmem:[%s4] sm:$0x1]
  %v145 = vperm.slane %v143, 0
  %v179 = vunpack.c.l.b16 %v111
  %v180 = vunpack.c.l.b16 %v112
  %v181 = vunpack.c.l.b16 %v113
  %v182 = vunpack.c.l.b16 %v114
  %v183 = vunpack.c.l.b16 %v115
  %v184 = vunpack.c.l.b16 %v116
  %v185 = vunpack.c.l.b16 %v117
  %v186 = vunpack.c.l.b16 %v118
  %v187 = vunpack.c.l.b16 %v119
  %v188 = vunpack.c.l.b16 %v120
  %v189 = vunpack.c.l.b16 %v121
  %v190 = vunpack.c.l.b16 %v122
  %v191 = vunpack.c.l.b16 %v123
  %v192 = vunpack.c.l.b16 %v124
  %v193 = vunpack.c.l.b16 %v125
  %v194 = vunpack.c.l.b16 %v126
  %v195 = vunpack.c.l.b16 %v127
  %v196 = vunpack.c.l.b16 %v128
  %v197 = vunpack.c.l.b16 %v129
  %v198 = vunpack.c.l.b16 %v130
  %v199 = vunpack.c.l.b16 %v131
  %v200 = vunpack.c.l.b16 %v132
  %v201 = vunpack.c.l.b16 %v133
  %v202 = vunpack.c.l.b16 %v134
  %v203 = vunpack.c.l.b16 %v135
  %v204 = vunpack.c.l.b16 %v136
  %v205 = vunpack.c.l.b16 %v137
  %v206 = vunpack.c.l.b16 %v138
  %v207 = vunpack.c.l.b16 %v139
  %v208 = vunpack.c.l.b16 %v140
  %v209 = vunpack.c.l.b16 %v141
  %v210 = vunpack.c.l.b16 %v142
  %v211 = vpack.c.b16 %v180, %v179
  %v212 = vpack.c.b16 %v182, %v181
  %v213 = vpack.c.b16 %v184, %v183
  %v214 = vpack.c.b16 %v186, %v185
  %v215 = vpack.c.b16 %v188, %v187
  %v216 = vpack.c.b16 %v190, %v189
  %v217 = vpack.c.b16 %v192, %v191
  %v218 = vpack.c.b16 %v194, %v193
  %v219 = vpack.c.b16 %v196, %v195
  %v220 = vpack.c.b16 %v198, %v197
  %v221 = vpack.c.b16 %v200, %v199
  %v222 = vpack.c.b16 %v202, %v201
  %v223 = vpack.c.b16 %v204, %v203
  %v224 = vpack.c.b16 %v206, %v205
  %v225 = vpack.c.b16 %v208, %v207
  %v226 = vpack.c.b16 %v210, %v209
  %243 = vmatpush.bf16.msra.mxu0 %v218
  %244 = vmatpush.bf16.msra.mxu0 %v217
  %245 = vmatpush.bf16.msra.mxu0 %v216
  %246 = vmatpush.bf16.msra.mxu0 %v215
  %247 = vmatpush.bf16.msra.mxu0 %v214
  %248 = vmatpush.bf16.msra.mxu0 %v213
  %249 = vmatpush.bf16.msra.mxu0 %v212
  %250 = vmatpush.bf16.msra.mxu0 %v211
  %251 = vmatmul.bf16.gmra.mxu0 %v95
  %v252 = vpop.f32.mrf.mxu0
  %v253 = vadd.f32 %v145, %v252
  %v254 = vpop.f32.mrf.mxu0
  %v255 = vadd.f32 %v145, %v254
  %256 = vmatmul.bf16.gmra.mxu0 %v96
  %v257 = vpop.f32.mrf.mxu0
  %v258 = vadd.f32 %v145, %v257
  %v259 = vpop.f32.mrf.mxu0
  %v260 = vadd.f32 %v145, %v259
  %261 = vdwg.mxu0
  %262 = vmatpush.bf16.msra.mxu0 %v226
  %263 = vmatpush.bf16.msra.mxu0 %v225
  %264 = vmatpush.bf16.msra.mxu0 %v224
  %265 = vmatpush.bf16.msra.mxu0 %v223
  %266 = vmatpush.bf16.msra.mxu0 %v222
  %267 = vmatpush.bf16.msra.mxu0 %v221
  %268 = vmatpush.bf16.msra.mxu0 %v220
  %269 = vmatpush.bf16.msra.mxu0 %v219
  %270 = vmatmul.bf16.gmra.mxu0 %v107
  %v271 = vpop.f32.mrf.mxu0
  %v272 = vadd.f32 %v253, %v271
  %v273 = vpop.f32.mrf.mxu0
  %v274 = vadd.f32 %v255, %v273
  %275 = vmatmul.bf16.gmra.mxu0 %v108
  %v276 = vpop.f32.mrf.mxu0
  %v277 = vadd.f32 %v258, %v276
  %v278 = vpop.f32.mrf.mxu0
  %v279 = vadd.f32 %v260, %v278
  %280 = vdwg.mxu0
  %v281 = vmax.f32 %v272, 0.0
  %v282 = vmax.f32 %v274, 0.0
  %v283 = vmax.f32 %v277, 0.0
  %v284 = vmax.f32 %v279, 0.0
  %285 = vst [vmem:[%s6] sm:$0xff] %v281
  %286 = vst [vmem:[%s6 + $0x8] sm:$0xff] %v282
  %287 = vst [vmem:[%s6 + $0x10] sm:$0xff] %v283
  %288 = vst [vmem:[%s6 + $0x18] sm:$0xff] %v284
  %v289 = vld [vmem:[%s5] sm:$0x1]
  %v291 = vperm.slane %v289, 0
  %v293 = vmul.f32 %v281, %v291
  %v294 = vmul.f32 %v282, %v291
  %v295 = vmul.f32 %v283, %v291
  %v296 = vmul.f32 %v284, %v291
  %297 = vadd.xlane.f32.xlu0 %v293
  %v298 = vpop.xlane.xlu0 %297
  %299 = vadd.xlane.f32.xlu0 %v294
  %v300 = vpop.xlane.xlu0 %299
  %301 = vadd.xlane.f32.xlu0 %v295
  %v302 = vpop.xlane.xlu0 %301
  %303 = vadd.xlane.f32.xlu0 %v296
  %v304 = vpop.xlane.xlu0 %303
  %v305 = vtanh.pop %v298
  %v306 = vtanh.pop %v300
  %v307 = vtanh.pop %v302
  %v308 = vtanh.pop %v304
  %vm309 = vcmask 7168
  %310 = vst.msk [vmem:[%s7] sm:$0xff] %vm309, %v305
  %311 = vst.msk [vmem:[%s7 + $0x8] sm:$0xff] %vm309, %v306
  %312 = vst.msk [vmem:[%s7 + $0x10] sm:$0xff] %vm309, %v307
  %313 = vst.msk [vmem:[%s7 + $0x18] sm:$0xff] %vm309, %v308
  // Predicated region
  $region26: #{topkpool_forward.8} parent=0 // pred_check
    _
  $region27: #{topkpool_forward.8} parent=0 // pred_check_branch
    %315 = sbr.rel (0) target = $region29
  $region28: #{topkpool_forward.8} parent=0 // pred_region
    _
  $region29: #{topkpool_forward.8} parent=0 // pred_fallthru
    _
  // Predicated region
  $region30: #{topkpool_forward.8} parent=0 // pred_check
    _
  $region31: #{topkpool_forward.8} parent=0 // pred_check_branch
    %317 = sbr.rel (0) target = $region33
  $region32: #{topkpool_forward.8} parent=0 // pred_region
    _
  $region33: #{topkpool_forward.8} parent=0 // pred_fallthru
    _
  // Predicated region
  $region34: #{topkpool_forward.8} parent=0 // pred_check
    _
  $region35: #{topkpool_forward.8} parent=0 // pred_check_branch
    %319 = sbr.rel (0) target = $region37
  $region36: #{topkpool_forward.8} parent=0 // pred_region
    _
  $region37: #{topkpool_forward.8} parent=0 // pred_fallthru
    _
  // Predicated region
  $region38: #{topkpool_forward.8} parent=0 // pred_check
    _
  $region39: #{topkpool_forward.8} parent=0 // pred_check_branch
    %321 = sbr.rel (0) target = $region41
  $region40: #{topkpool_forward.8} parent=0 // pred_region
    _
  $region41: #{topkpool_forward.8} parent=0 // pred_fallthru
    _

// kernel: topkpool_forward.11
$region0: #{topkpool_forward.11}
  #allocation0 [shape = 'u32[]', space=smem, size = 0x4, offset = 0x4, fixed_abs, tag = 'smem constant byte address 0x4 - core index']
  #allocation1 [shape = 'u32[72,128]{1,0:T(1,128)}', space=vmem, size = 0x9000, scoped, tag = 'internal scratch']
  %s0 = inlined_call_operand.vmem [shape: f32[32,128], index: 0, kind: input, shape index: {}]
  %s1 = inlined_call_operand.vmem [shape: f32[32,1], index: 1, kind: input, shape index: {}]
  %s2 = inlined_call_operand.vmem [shape: f32[32,1], index: 2, kind: input, shape index: {}]
  %s3 = inlined_call_operand.vmem [shape: f32[2,32], index: 3, kind: input, shape index: {}]
  %s4 = inlined_call_operand.vmem [shape: f32[32,1], index: 4, kind: input, shape index: {}]
  %s5 = inlined_call_operand.vmem [shape: f32[2,256], index: 5, kind: input, shape index: {}]
  %s6 = inlined_call_operand.vmem [shape: f32[256,128], index: 6, kind: input, shape index: {}]
  %s7 = inlined_call_operand.vmem [shape: f32[1,128], index: 7, kind: input, shape index: {}]
  %s8 = inlined_call_operand.vmem [shape: f32[128,64], index: 8, kind: input, shape index: {}]
  %s9 = inlined_call_operand.vmem [shape: f32[1,64], index: 9, kind: input, shape index: {}]
  %s10 = inlined_call_operand.vmem [shape: f32[64,6], index: 10, kind: input, shape index: {}]
  %s11 = inlined_call_operand.vmem [shape: f32[1,6], index: 11, kind: input, shape index: {}]
  %s12 = inlined_call_operand.hbm [shape: f32[2,6], index: 12, kind: output, shape index: {}]
  %s13 = sld [smem:[#allocation0]]
  $region58: #{topkpool_forward.11} parent=0
    _
  %s15 = ssub.s32 1, %s13
  %s16 = scalar_select 0, %s15, %s13
  $region1: #{topkpool_forward.11} parent=0
    #allocation2 [shape = 'u8[1024]{0}', space=vmem, size = 0x400, scoped, tag = 'output window, operand 0, single buffered']
    #allocation3 [shape = 's32[1]{0}', space=sflag, size = 0x4, scoped, tag = 'scoped memory for topkpool_forward.11']
    %17 = vsyncpa [#allocation3], 0
    // Predicated region
    $region2: #{topkpool_forward.11} parent=1 // pred_check
      _
    $region3: #{topkpool_forward.11} parent=1 // pred_check_branch
      %19 = sbr.rel (0) target = $region5
    $region4: #{topkpool_forward.11} parent=1 // pred_region
      _
    $region5: #{topkpool_forward.11} parent=1 // pred_fallthru
      _
    // Predicated region
    $region6: #{topkpool_forward.11} parent=1 // pred_check
      _
    $region7: #{topkpool_forward.11} parent=1 // pred_check_branch
      %21 = sbr.rel (0) target = $region9
    $region8: #{topkpool_forward.11} parent=1 // pred_region
      _
    $region9: #{topkpool_forward.11} parent=1 // pred_fallthru
      _
    // Predicated region
    $region10: #{topkpool_forward.11} parent=1 // pred_check
      _
    $region11: #{topkpool_forward.11} parent=1 // pred_check_branch
      %23 = sbr.rel (0) target = $region13
    $region12: #{topkpool_forward.11} parent=1 // pred_region
      _
    $region13: #{topkpool_forward.11} parent=1 // pred_fallthru
      _
    // Predicated region
    $region14: #{topkpool_forward.11} parent=1 // pred_check
      _
    $region15: #{topkpool_forward.11} parent=1 // pred_check_branch
      %25 = sbr.rel (0) target = $region17
    $region16: #{topkpool_forward.11} parent=1 // pred_region
      _
    $region17: #{topkpool_forward.11} parent=1 // pred_fallthru
      _
    // Predicated region
    $region18: #{topkpool_forward.11} parent=1 // pred_check
      _
    $region19: #{topkpool_forward.11} parent=1 // pred_check_branch
      %27 = sbr.rel (0) target = $region21
    $region20: #{topkpool_forward.11} parent=1 // pred_region
      _
    $region21: #{topkpool_forward.11} parent=1 // pred_fallthru
      _
    // Predicated region
    $region22: #{topkpool_forward.11} parent=1 // pred_check
      _
    $region23: #{topkpool_forward.11} parent=1 // pred_check_branch
      %29 = sbr.rel (0) target = $region25
    $region24: #{topkpool_forward.11} parent=1 // pred_region
      _
    $region25: #{topkpool_forward.11} parent=1 // pred_fallthru
      _
    // Predicated region
    $region26: #{topkpool_forward.11} parent=1 // pred_check
      _
    $region27: #{topkpool_forward.11} parent=1 // pred_check_branch
      %31 = sbr.rel (0) target = $region29
    $region28: #{topkpool_forward.11} parent=1 // pred_region
      _
    $region29: #{topkpool_forward.11} parent=1 // pred_fallthru
      _
    // Predicated region
    $region30: #{topkpool_forward.11} parent=1 // pred_check
      _
    $region31: #{topkpool_forward.11} parent=1 // pred_check_branch
      %33 = sbr.rel (0) target = $region33
    $region32: #{topkpool_forward.11} parent=1 // pred_region
      _
    $region33: #{topkpool_forward.11} parent=1 // pred_fallthru
      _
    // Predicated region
    $region34: #{topkpool_forward.11} parent=1 // pred_check
      _
    $region35: #{topkpool_forward.11} parent=1 // pred_check_branch
      %35 = sbr.rel (0) target = $region37
    $region36: #{topkpool_forward.11} parent=1 // pred_region
      _
    $region37: #{topkpool_forward.11} parent=1 // pred_fallthru
      _
    // Predicated region
    $region38: #{topkpool_forward.11} parent=1 // pred_check
      _
    $region39: #{topkpool_forward.11} parent=1 // pred_check_branch
      %37 = sbr.rel (0) target = $region41
    $region40: #{topkpool_forward.11} parent=1 // pred_region
      _
    $region41: #{topkpool_forward.11} parent=1 // pred_fallthru
      _
    // Predicated region
    $region42: #{topkpool_forward.11} parent=1 // pred_check
      _
    $region43: #{topkpool_forward.11} parent=1 // pred_check_branch
      %39 = sbr.rel (0) target = $region45
    $region44: #{topkpool_forward.11} parent=1 // pred_region
      _
    $region45: #{topkpool_forward.11} parent=1 // pred_fallthru
      _
    // Predicated region
    $region46: #{topkpool_forward.11} parent=1 // pred_check
      _
    $region47: #{topkpool_forward.11} parent=1 // pred_check_branch
      %41 = sbr.rel (0) target = $region49
    $region48: #{topkpool_forward.11} parent=1 // pred_region
      _
    $region49: #{topkpool_forward.11} parent=1 // pred_fallthru
      _
    %v42 = vld [vmem:[%s0] sm:$0xff]
    %v43 = vld [vmem:[%s0 + $0x8] sm:$0xff]
    %v44 = vld [vmem:[%s0 + $0x10] sm:$0xff]
    %v45 = vld [vmem:[%s0 + $0x18] sm:$0xff]
    %v46 = vld [vmem:[%s2] sm:$0xff]
    %v47 = vld [vmem:[%s2 + $0x8] sm:$0xff]
    %v48 = vld [vmem:[%s2 + $0x10] sm:$0xff]
    %v49 = vld [vmem:[%s2 + $0x18] sm:$0xff]
    %v50 = vld [vmem:[%s1] sm:$0xff]
    %v51 = vld [vmem:[%s1 + $0x8] sm:$0xff]
    %v52 = vld [vmem:[%s1 + $0x10] sm:$0xff]
    %v53 = vld [vmem:[%s1 + $0x18] sm:$0xff]
    %55 = vset.pattern.permute.xlu0 0
    %56 = vperm.xlu0 %55, %v50
    %v57 = vpop.permute.xlu0 %56
    %60 = vset.pattern.permute.xlu0 0
    %61 = vperm.xlu0 %60, %v51
    %v62 = vpop.permute.xlu0 %61
    %65 = vset.pattern.permute.xlu0 0
    %66 = vperm.xlu0 %65, %v52
    %v67 = vpop.permute.xlu0 %66
    %70 = vset.pattern.permute.xlu0 0
    %71 = vperm.xlu0 %70, %v53
    %v72 = vpop.permute.xlu0 %71
    %v74 = vmul.f32 %v42, %v57
    %v75 = vmul.f32 %v43, %v62
    %v76 = vmul.f32 %v44, %v67
    %v77 = vmul.f32 %v45, %v72
    %v78 = vld [vmem:[%s3] sm:$0x3]
    %vm79 = vcmask 261120
    %v81 = vsel %vm79, %v78, 0
    %83 = vmatpush.msra.mxu0 0.0
    %84 = vmatpush.msra.mxu0 0.0
    %85 = vmatpush.msra.mxu0 0.0
    %86 = vmatpush.msra.mxu0 0.0
    %87 = vmatpush.msra.mxu0 0.0
    %88 = vmatpush.msra.mxu0 0.0
    %89 = vmatpush.msra.mxu0 0.0
    %90 = vmatpush.msra.mxu0 0.0
    %91 = vmatpush.msra.mxu0 0.0
    %92 = vmatpush.msra.mxu0 0.0
    %93 = vmatpush.msra.mxu0 0.0
    %94 = vmatpush.msra.mxu0 0.0
    %95 = vmatpush.msra.mxu0 %v77
    %96 = vmatpush.msra.mxu0 %v76
    %97 = vmatpush.msra.mxu0 %v75
    %98 = vmatpush.msra.mxu0 %v74
    %99 = vmatmul.f32.gmra.mxu0 %v81
    %v100 = vpop.f32.mrf.mxu0
    %v101 = vadd.f32 0.0, %v100
    %102 = vdwg.mxu0
    %103 = vmatpush.msra.mxu0 0.0
    %104 = vmatpush.msra.mxu0 0.0
    %105 = vmatpush.msra.mxu0 0.0
    %106 = vmatpush.msra.mxu0 0.0
    %107 = vmatpush.msra.mxu0 0.0
    %108 = vmatpush.msra.mxu0 0.0
    %109 = vmatpush.msra.mxu0 0.0
    %110 = vmatpush.msra.mxu0 0.0
    %111 = vmatpush.msra.mxu0 0.0
    %112 = vmatpush.msra.mxu0 0.0
    %113 = vmatpush.msra.mxu0 0.0
    %114 = vmatpush.msra.mxu0 0.0
    %115 = vmatpush.msra.mxu0 %v49
    %116 = vmatpush.msra.mxu0 %v48
    %117 = vmatpush.msra.mxu0 %v47
    %118 = vmatpush.msra.mxu0 %v46
    %119 = vmatmul.f32.gmra.mxu0 %v81
    %v120 = vpop.f32.mrf.mxu0
    %v121 = vadd.f32 0.0, %v120
    %122 = vdwg.mxu0
    %v123 = vmax.f32 %v121, 1.0
    %125 = vset.pattern.permute.xlu0 0
    %126 = vperm.xlu0 %125, %v123
    %v127 = vpop.permute.xlu0 %126
    %v129 = vrcp.pop %v127
    %v130 = vmul.f32 %v127, %v129
    %v131 = vsub.f32 1.0, %v130
    %v132 = vmul.f32 %v129, %v131
    %v133 = vadd.f32 %v129, %v132
    %vm134 = vweird.f32 %v127
    %vm135 = vweird.f32 %v129
    %vm136 = vmor %vm134, %vm135
    %v137 = vsel %vm136, %v129, %v133
    %v138 = vand.u32 2147483647, %v127
    %vm139 = vcmp.eq.f32.partialorder %v138, 8.507059e+37
    %v140 = vand.u32 %v127, 2147483648
    %v141 = vor.u32 1.1754944e-38, %v140
    %v142 = vsel %vm139, %v141, %v137
    %v143 = vmul.f32 %v101, %v142
    %vm144 = vcmp.gt.f32.partialorder %v46, 0.5
    %vm145 = vcmp.gt.f32.partialorder %v47, 0.5
    %vm146 = vcmp.gt.f32.partialorder %v48, 0.5
    %vm147 = vcmp.gt.f32.partialorder %v49, 0.5
    %v148 = vsel %vm144, 1, 0
    %v149 = vsel %vm145, 1, 0
    %v150 = vsel %vm146, 1, 0
    %v151 = vsel %vm147, 1, 0
    %152 = vset.pattern.permute.xlu0 0
    %153 = vperm.xlu0 %152, %v148
    %v154 = vpop.permute.xlu0 %153
    %155 = vset.pattern.permute.xlu0 0
    %156 = vperm.xlu0 %155, %v149
    %v157 = vpop.permute.xlu0 %156
    %158 = vset.pattern.permute.xlu0 0
    %159 = vperm.xlu0 %158, %v150
    %v160 = vpop.permute.xlu0 %159
    %161 = vset.pattern.permute.xlu0 0
    %162 = vperm.xlu0 %161, %v151
    %v163 = vpop.permute.xlu0 %162
    %vm164 = vcmp.eq.s32.totalorder %v154, 1
    %vm165 = vcmp.eq.s32.totalorder %v157, 1
    %vm166 = vcmp.eq.s32.totalorder %v160, 1
    %vm167 = vcmp.eq.s32.totalorder %v163, 1
    %v168 = vsel %vm164, %v74, -3e+38
    %v169 = vsel %vm165, %v75, -3e+38
    %v170 = vsel %vm166, %v76, -3e+38
    %v171 = vsel %vm167, %v77, -3e+38
    %v172 = vmax.f32 %v168, %v169
    %v173 = vrot.slane %v172, 4
    %v174 = vmax.f32 %v172, %v173
    %v175 = vrot.slane %v174, 2
    %v176 = vmax.f32 %v174, %v175
    %v177 = vrot.slane %v176, 1
    %v178 = vmax.f32 %v176, %v177
    %v179 = vmax.f32 %v170, %v171
    %v180 = vrot.slane %v179, 4
    %v181 = vmax.f32 %v179, %v180
    %v182 = vrot.slane %v181, 2
    %v183 = vmax.f32 %v181, %v182
    %v184 = vrot.slane %v183, 1
    %v185 = vmax.f32 %v183, %v184
    %vm186 = vcmp.gt.f32.partialorder %v121, 0.5
    %v187 = vsel %vm186, 1, 0
    %188 = vset.pattern.permute.xlu0 0
    %189 = vperm.xlu0 %188, %v187
    %v190 = vpop.permute.xlu0 %189
    %vm191 = vcmp.eq.s32.totalorder %v190, 1
    %vm194 = vcmask 1041409
    %v195 = vsel %vm194, %v185, %v178
    %v197 = vsel %vm191, %v195, 0.0
    %v198 = vld [vmem:[%s5] sm:$0x3]
    %v199 = vadd.f32 %v197, %v198
    %v200 = vld [vmem:[%s5 + $0x2] sm:$0x3]
    %v201 = vadd.f32 %v143, %v200
    %v202 = vld [vmem:[%s6] sm:$0xff]
    %v203 = vld [vmem:[%s6 + $0x8] sm:$0xff]
    %v204 = vld [vmem:[%s6 + $0x10] sm:$0xff]
    %v205 = vld [vmem:[%s6 + $0x18] sm:$0xff]
    %v206 = vld [vmem:[%s6 + $0x20] sm:$0xff]
    %v207 = vld [vmem:[%s6 + $0x28] sm:$0xff]
    %v208 = vld [vmem:[%s6 + $0x30] sm:$0xff]
    %v209 = vld [vmem:[%s6 + $0x38] sm:$0xff]
    %v210 = vld [vmem:[%s6 + $0x40] sm:$0xff]
    %v211 = vld [vmem:[%s6 + $0x48] sm:$0xff]
    %v212 = vld [vmem:[%s6 + $0x50] sm:$0xff]
    %v213 = vld [vmem:[%s6 + $0x58] sm:$0xff]
    %v214 = vld [vmem:[%s6 + $0x60] sm:$0xff]
    %v215 = vld [vmem:[%s6 + $0x68] sm:$0xff]
    %v216 = vld [vmem:[%s6 + $0x70] sm:$0xff]
    %v217 = vld [vmem:[%s6 + $0x78] sm:$0xff]
    %v218 = vld [vmem:[%s6 + $0x80] sm:$0xff]
    %v219 = vld [vmem:[%s6 + $0x88] sm:$0xff]
    %v220 = vld [vmem:[%s6 + $0x90] sm:$0xff]
    %v221 = vld [vmem:[%s6 + $0x98] sm:$0xff]
    %v222 = vld [vmem:[%s6 + $0xa0] sm:$0xff]
    %v223 = vld [vmem:[%s6 + $0xa8] sm:$0xff]
    %v224 = vld [vmem:[%s6 + $0xb0] sm:$0xff]
    %v225 = vld [vmem:[%s6 + $0xb8] sm:$0xff]
    %v226 = vld [vmem:[%s6 + $0xc0] sm:$0xff]
    %v227 = vld [vmem:[%s6 + $0xc8] sm:$0xff]
    %v228 = vld [vmem:[%s6 + $0xd0] sm:$0xff]
    %v229 = vld [vmem:[%s6 + $0xd8] sm:$0xff]
    %v230 = vld [vmem:[%s6 + $0xe0] sm:$0xff]
    %v231 = vld [vmem:[%s6 + $0xe8] sm:$0xff]
    %v232 = vld [vmem:[%s6 + $0xf0] sm:$0xff]
    %v233 = vld [vmem:[%s6 + $0xf8] sm:$0xff]
    %234 = vmatpush.msra.mxu0 %v233
    %235 = vmatpush.msra.mxu0 %v232
    %236 = vmatpush.msra.mxu0 %v231
    %237 = vmatpush.msra.mxu0 %v230
    %238 = vmatpush.msra.mxu0 %v229
    %239 = vmatpush.msra.mxu0 %v228
    %240 = vmatpush.msra.mxu0 %v227
    %241 = vmatpush.msra.mxu0 %v226
    %242 = vmatpush.msra.mxu0 %v225
    %243 = vmatpush.msra.mxu0 %v224
    %244 = vmatpush.msra.mxu0 %v223
    %245 = vmatpush.msra.mxu0 %v222
    %246 = vmatpush.msra.mxu0 %v221
    %247 = vmatpush.msra.mxu0 %v220
    %248 = vmatpush.msra.mxu0 %v219
    %249 = vmatpush.msra.mxu0 %v218
    %250 = vmatmul.f32.gmra.mxu0 %v201
    %v251 = vpop.f32.mrf.mxu0
    %v252 = vadd.f32 0.0, %v251
    %253 = vdwg.mxu0
    %254 = vmatpush.msra.mxu0 %v217
    %255 = vmatpush.msra.mxu0 %v216
    %256 = vmatpush.msra.mxu0 %v215
    %257 = vmatpush.msra.mxu0 %v214
    %258 = vmatpush.msra.mxu0 %v213
    %259 = vmatpush.msra.mxu0 %v212
    %260 = vmatpush.msra.mxu0 %v211
    %261 = vmatpush.msra.mxu0 %v210
    %262 = vmatpush.msra.mxu0 %v209
    %263 = vmatpush.msra.mxu0 %v208
    %264 = vmatpush.msra.mxu0 %v207
    %265 = vmatpush.msra.mxu0 %v206
    %266 = vmatpush.msra.mxu0 %v205
    %267 = vmatpush.msra.mxu0 %v204
    %268 = vmatpush.msra.mxu0 %v203
    %269 = vmatpush.msra.mxu0 %v202
    %270 = vmatmul.f32.gmra.mxu0 %v199
    %v271 = vpop.f32.mrf.mxu0
    %v272 = vadd.f32 %v252, %v271
    %273 = vdwg.mxu0
    %v274 = vld [vmem:[%s7] sm:$0x1]
    %v276 = vperm.slane %v274, 0
    %v278 = vadd.f32 %v272, %v276
    %v279 = vmax.f32 %v278, 0.0
    %v280 = vld [vmem:[%s8] sm:$0xff]
    %v281 = vld [vmem:[%s8 + $0x8] sm:$0xff]
    %v282 = vld [vmem:[%s8 + $0x10] sm:$0xff]
    %v283 = vld [vmem:[%s8 + $0x18] sm:$0xff]
    %v284 = vld [vmem:[%s8 + $0x20] sm:$0xff]
    %v285 = vld [vmem:[%s8 + $0x28] sm:$0xff]
    %v286 = vld [vmem:[%s8 + $0x30] sm:$0xff]
    %v287 = vld [vmem:[%s8 + $0x38] sm:$0xff]
    %v288 = vld [vmem:[%s8 + $0x40] sm:$0xff]
    %v289 = vld [vmem:[%s8 + $0x48] sm:$0xff]
    %v290 = vld [vmem:[%s8 + $0x50] sm:$0xff]
    %v291 = vld [vmem:[%s8 + $0x58] sm:$0xff]
    %v292 = vld [vmem:[%s8 + $0x60] sm:$0xff]
    %v293 = vld [vmem:[%s8 + $0x68] sm:$0xff]
    %v294 = vld [vmem:[%s8 + $0x70] sm:$0xff]
    %v295 = vld [vmem:[%s8 + $0x78] sm:$0xff]
    %v296 = vld [vmem:[%s9] sm:$0x1]
    %v298 = vperm.slane %v296, 0
    %300 = vmatpush.msra.mxu0 %v295
    %301 = vmatpush.msra.mxu0 %v294
    %302 = vmatpush.msra.mxu0 %v293
    %303 = vmatpush.msra.mxu0 %v292
    %304 = vmatpush.msra.mxu0 %v291
    %305 = vmatpush.msra.mxu0 %v290
    %306 = vmatpush.msra.mxu0 %v289
    %307 = vmatpush.msra.mxu0 %v288
    %308 = vmatpush.msra.mxu0 %v287
    %309 = vmatpush.msra.mxu0 %v286
    %310 = vmatpush.msra.mxu0 %v285
    %311 = vmatpush.msra.mxu0 %v284
    %312 = vmatpush.msra.mxu0 %v283
    %313 = vmatpush.msra.mxu0 %v282
    %314 = vmatpush.msra.mxu0 %v281
    %315 = vmatpush.msra.mxu0 %v280
    %316 = vmatmul.f32.gmra.mxu0 %v279
    %v317 = vpop.f32.mrf.mxu0
    %v318 = vadd.f32 %v298, %v317
    %319 = vdwg.mxu0
    %v320 = vmax.f32 %v318, 0.0
    %v321 = vld [vmem:[%s10] sm:$0xff]
    %v322 = vld [vmem:[%s10 + $0x8] sm:$0xff]
    %v323 = vld [vmem:[%s10 + $0x10] sm:$0xff]
    %v324 = vld [vmem:[%s10 + $0x18] sm:$0xff]
    %v325 = vld [vmem:[%s10 + $0x20] sm:$0xff]
    %v326 = vld [vmem:[%s10 + $0x28] sm:$0xff]
    %v327 = vld [vmem:[%s10 + $0x30] sm:$0xff]
    %v328 = vld [vmem:[%s10 + $0x38] sm:$0xff]
    %v329 = vld [vmem:[%s11] sm:$0x1]
    %v331 = vperm.slane %v329, 0
    %vm333 = vcmask 523264
    %v335 = vsel %vm333, %v320, 0
    %337 = vmatpush.msra.mxu0 0.0
    %338 = vmatpush.msra.mxu0 0.0
    %339 = vmatpush.msra.mxu0 0.0
    %340 = vmatpush.msra.mxu0 0.0
    %341 = vmatpush.msra.mxu0 0.0
    %342 = vmatpush.msra.mxu0 0.0
    %343 = vmatpush.msra.mxu0 0.0
    %344 = vmatpush.msra.mxu0 0.0
    %345 = vmatpush.msra.mxu0 %v328
    %346 = vmatpush.msra.mxu0 %v327
    %347 = vmatpush.msra.mxu0 %v326
    %348 = vmatpush.msra.mxu0 %v325
    %349 = vmatpush.msra.mxu0 %v324
    %350 = vmatpush.msra.mxu0 %v323
    %351 = vmatpush.msra.mxu0 %v322
    %352 = vmatpush.msra.mxu0 %v321
    %353 = vmatmul.f32.gmra.mxu0 %v335
    %v354 = vpop.f32.mrf.mxu0
    %v355 = vadd.f32 %v331, %v354
    %356 = vdwg.mxu0
    %vm357 = vcmask 41984
    %v358 = vsel %vm357, %v355, -inf
    %359 = vmax.xlane.f32.xlu0 %v358
    %v360 = vpop.xlane.xlu0 %359
    %v361 = vsub.f32 %v355, %v360
    %v362 = vmul.f32 %v361, 1.442695
    %v363 = vpow.pop %v362
    %v364 = vsel %vm357, %v363, 0.0
    %365 = vadd.xlane.f32.xlu0 %v364
    %v366 = vpop.xlane.xlu0 %365
    %v367 = vlog2.pop %v366
    %v368 = vmul.f32 %v367, 0.6931472
    %v369 = vadd.f32 %v368, %v360
    %v370 = vsub.f32 %v355, %v369
    %371 = vst.msk [vmem:[#allocation2] sm:$0x3] %vm357, %v370
    // Predicated region
    $region50: #{topkpool_forward.11} parent=1 // pred_check
      _
    $region51: #{topkpool_forward.11} parent=1 // pred_check_branch
      %373 = sbr.rel (0) target = $region53
    $region52: #{topkpool_forward.11} parent=1 // pred_region
      %375 = vsyncadd [#allocation3], 0
      %s377 = sshll.u32 [#allocation2], 4
      %s378 = int_to_ptr.vmem [resolvable:$true] %s377
      %s379 = sshll.u32 %s12, 4
      %s380 = int_to_ptr.hbm [resolvable:$true] %s379
      %382 = dma.vmem_to_hbm [thread:$0]  %s378, 32, %s380, [#allocation3]
    $region53: #{topkpool_forward.11} parent=1 // pred_fallthru
      _
    // Predicated region
    $region54: #{topkpool_forward.11} parent=1 // pred_check
      _
    $region55: #{topkpool_forward.11} parent=1 // pred_check_branch
      %384 = sbr.rel (0) target = $region57
    $region56: #{topkpool_forward.11} parent=1 // pred_region
      %386 = dma.done [#allocation3], 32
    $region57: #{topkpool_forward.11} parent=1 // pred_fallthru
      _
    %387 = vsyncpa [#allocation3], 1

</llo_original>
